<compile_context>
chip_gen: v7x
topology: tpu7x:2x2x1
jax: 0.10.0
libtpu: 0.0.40
codegen_flags: <defaults>
</compile_context>

<pallas_src>
import functools

import jax
import jax.numpy as jnp
from jax.experimental import pallas as pl
from jax.experimental.pallas import tpu as pltpu


# ----------------------------- kernel helpers ------------------------------

def _linear(x, w, b):
    return jnp.dot(x, w, preferred_element_type=jnp.float32) + b


def _layer_norm(x, gamma, beta, eps=1e-5):
    mu = jnp.mean(x, axis=-1, keepdims=True)
    var = jnp.mean((x - mu) ** 2, axis=-1, keepdims=True)
    return (x - mu) * jax.lax.rsqrt(var + eps) * gamma + beta


# ------------------------------ fused kernel --------------------------------
# x_ref is the two views stacked on the leading axis: (2B, F) = [x1; x2].
# out_ref is lane-dense (B, 4F) = [x1_rec | x2_rec | x1_sw | x2_sw].

def switchtab_kernel(x_ref,
                     wq_ref, bq_ref, wk_ref, bk_ref, wv_ref, bv_ref,
                     wo_ref, bo_ref, ln1g_ref, ln1b_ref,
                     w1_ref, b1_ref, w2_ref, b2_ref, ln2g_ref, ln2b_ref,
                     ws_ref, bs_ref, wm_ref, bm_ref,
                     wdm_ref, wds_ref, bd_ref,
                     out_ref, *, num_heads, batch):
    x = x_ref[...].astype(jnp.float32)
    two_b, F = x.shape
    B = batch
    dh = F // num_heads
    scale = 1.0 / (dh ** 0.5)

    # --- encoder: fused QKV on the stacked (2B, F) slab -----------------
    q = _linear(x, wq_ref[...], bq_ref[...])
    k = _linear(x, wk_ref[...], bk_ref[...])
    v = _linear(x, wv_ref[...], bv_ref[...])

    # Block-diagonal mask: a row may only attend to keys of its own view.
    row = jax.lax.broadcasted_iota(jnp.int32, (two_b, two_b), 0)
    col = jax.lax.broadcasted_iota(jnp.int32, (two_b, two_b), 1)
    same_view = (row < B) == (col < B)

    wo = wo_ref[...]
    attn = jnp.zeros((two_b, F), jnp.float32)
    for h in range(num_heads):                      # static unroll, H is tiny
        lo = h * dh
        qh = q[:, lo:lo + dh]
        kh = k[:, lo:lo + dh]
        vh = v[:, lo:lo + dh]
        # contract last dims directly (no materialized transpose)
        s = jax.lax.dot_general(qh, kh, (((1,), (1,)), ((), ())),
                                preferred_element_type=jnp.float32) * scale
        s = jnp.where(same_view, s, -1e30)
        m = jnp.max(s, axis=-1, keepdims=True)
        e = jnp.exp(s - m)
        inv = pl.reciprocal(jnp.sum(e, axis=-1, keepdims=True), approx=True)
        p = e * inv
        oh = jnp.dot(p, vh, preferred_element_type=jnp.float32)
        # concat(heads) @ wo == sum_h head_h @ wo[rows of head h]
        attn = attn + jnp.dot(oh, wo[lo:lo + dh, :],
                              preferred_element_type=jnp.float32)
    attn = attn + bo_ref[...]

    h1 = _layer_norm(x + attn, ln1g_ref[...], ln1b_ref[...])
    ff = jnp.maximum(_linear(h1, w1_ref[...], b1_ref[...]), 0.0)
    ff = _linear(ff, w2_ref[...], b2_ref[...])
    z = _layer_norm(h1 + ff, ln2g_ref[...], ln2b_ref[...])        # (2B, F)

    # --- projectors + decoder: matmuls on the stacked slab ---------------
    s_all = _linear(z, ws_ref[...], bs_ref[...])                  # (2B, F)
    m_all = _linear(z, wm_ref[...], bm_ref[...])                  # (2B, F)
    dm = jnp.dot(m_all, wdm_ref[...], preferred_element_type=jnp.float32)
    ds = jnp.dot(s_all, wds_ref[...], preferred_element_type=jnp.float32)
    bd = bd_ref[...]

    dm1, dm2 = dm[:B], dm[B:]
    ds1, ds2 = ds[:B], ds[B:]
    x1_rec = dm1 + ds1 + bd
    x2_rec = dm2 + ds2 + bd
    x1_sw = dm2 + ds1 + bd
    x2_sw = dm1 + ds2 + bd

    # lane-dense (B, 4F) store (a single unmasked (8,128) slab at F=32)
    out_ref[...] = jnp.concatenate([x1_rec, x2_rec, x1_sw, x2_sw], axis=-1)


# --------------------------------- wrapper ----------------------------------

def switchtab_forward(x1, x2, params, num_heads):
    B, F = x1.shape
    e = params["enc"]
    p = params["proj_dec"]
    x = jnp.concatenate([x1, x2], axis=0)            # (2B, F), views on sublanes

    args = (x,
            e["wq"], e["bq"], e["wk"], e["bk"], e["wv"], e["bv"],
            e["wo"], e["bo"], e["ln1g"], e["ln1b"],
            e["w1"], e["b1"], e["w2"], e["b2"], e["ln2g"], e["ln2b"],
            p["ws"], p["bs"], p["wm"], p["bm"],
            p["wd_m"], p["wd_s"], p["bd"])

    vmem = pl.BlockSpec(memory_space=pltpu.MemorySpace.VMEM)
    out = pl.pallas_call(
        functools.partial(switchtab_kernel, num_heads=num_heads, batch=B),
        out_shape=jax.ShapeDtypeStruct((B, 4 * F), jnp.float32),
        in_specs=[vmem] * len(args),
        out_specs=vmem,
    )(*args)

    return (out[:, 0 * F:1 * F], out[:, 1 * F:2 * F],
            out[:, 2 * F:3 * F], out[:, 3 * F:4 * F])


# ------------------------------ parameter init ------------------------------

def init_params(key, feature_size, num_classes, num_heads):
    F = feature_size
    dff = 2 * F

    def lin(k, fan_in, fan_out):
        bound = 1.0 / (fan_in ** 0.5)
        kw, kb = jax.random.split(k)
        w = jax.random.uniform(kw, (fan_in, fan_out), jnp.float32, -bound, bound)
        b = jax.random.uniform(kb, (1, fan_out), jnp.float32, -bound, bound)
        return w, b

    ks = jax.random.split(key, 12)
    wq, bq = lin(ks[0], F, F)
    wk, bk = lin(ks[1], F, F)
    wv, bv = lin(ks[2], F, F)
    wo, bo = lin(ks[3], F, F)
    w1, b1 = lin(ks[4], F, dff)
    w2, b2 = lin(ks[5], dff, F)
    enc = dict(wq=wq, bq=bq, wk=wk, bk=bk, wv=wv, bv=bv, wo=wo, bo=bo,
               w1=w1, b1=b1, w2=w2, b2=b2,
               ln1g=jnp.ones((1, F), jnp.float32), ln1b=jnp.zeros((1, F), jnp.float32),
               ln2g=jnp.ones((1, F), jnp.float32), ln2b=jnp.zeros((1, F), jnp.float32))

    ws, bs = lin(ks[6], F, F)          # projector_s
    wm, bm = lin(ks[7], F, F)          # projector_m
    wd, bd = lin(ks[8], 2 * F, F)      # decoder: input is cat((mutual, salient))
    proj_dec = dict(ws=ws, bs=bs, wm=wm, bm=bm,
                    wd_m=wd[:F, :], wd_s=wd[F:, :], bd=bd)

    # Predictor params exist in the module but are unused by forward().
    wp, bp = lin(ks[9], F, num_classes)
    pred = dict(wp=wp, bp=bp)

    return dict(enc=enc, proj_dec=proj_dec, pred=pred)


# -------------------------------- reference ---------------------------------

def reference_forward(x1, x2, params, num_heads):
    e = params["enc"]
    F = x1.shape[-1]
    dh = F // num_heads

    def enc(x):
        q = x @ e["wq"] + e["bq"]
        k = x @ e["wk"] + e["bk"]
        v = x @ e["wv"] + e["bv"]
        outs = []
        for h in range(num_heads):
            qh, kh, vh = (t[:, h * dh:(h + 1) * dh] for t in (q, k, v))
            s = qh @ kh.T / (dh ** 0.5)
            p = jax.nn.softmax(s, axis=-1)
            outs.append(p @ vh)
        attn = jnp.concatenate(outs, axis=1) @ e["wo"] + e["bo"]

        def ln(y, g, b):
            mu = y.mean(-1, keepdims=True)
            var = ((y - mu) ** 2).mean(-1, keepdims=True)
            return (y - mu) / jnp.sqrt(var + 1e-5) * g + b

        h1 = ln(x + attn, e["ln1g"], e["ln1b"])
        ff = jnp.maximum(h1 @ e["w1"] + e["b1"], 0.0) @ e["w2"] + e["b2"]
        return ln(h1 + ff, e["ln2g"], e["ln2b"])

    p = params["proj_dec"]
    z1, z2 = enc(x1), enc(x2)
    s1, m1 = z1 @ p["ws"] + p["bs"], z1 @ p["wm"] + p["bm"]
    s2, m2 = z2 @ p["ws"] + p["bs"], z2 @ p["wm"] + p["bm"]
    dec = lambda m, s: m @ p["wd_m"] + s @ p["wd_s"] + p["bd"]
    return dec(m1, s1), dec(m2, s2), dec(m2, s1), dec(m1, s2)


# ----------------------------------- main ------------------------------------

if __name__ == "__main__":
    B, F, C, H = 8, 32, 3, 2   # batch, feature_size, num_classes, num_heads

    key = jax.random.PRNGKey(0)
    kx1, kx2, kp = jax.random.split(key, 3)
    x1 = jax.random.normal(kx1, (B, F), jnp.float32)
    x2 = jax.random.normal(kx2, (B, F), jnp.float32)
    params = init_params(kp, F, C, H)

    fwd = jax.jit(functools.partial(switchtab_forward, num_heads=H))
    outs = jax.block_until_ready(fwd(x1, x2, params))

    refs = reference_forward(x1, x2, params, H)
    for o, r in zip(outs, refs):
        assert o.shape == (B, F)
        # slightly looser tolerance: softmax denom uses approx (EUP) reciprocal
        assert jnp.allclose(o, r, atol=2e-3, rtol=2e-3), "mismatch vs reference"

    print("KERNEL_OK")
</pallas_src>

<mosaic_0001>
module attributes {stable_mosaic.version = 11 : i64} {
  func.func @switchtab_kernel(%arg0: memref<16x32xf32, #tpu.memory_space<vmem>>, %arg1: memref<32x32xf32, #tpu.memory_space<vmem>>, %arg2: memref<1x32xf32, #tpu.memory_space<vmem>>, %arg3: memref<32x32xf32, #tpu.memory_space<vmem>>, %arg4: memref<1x32xf32, #tpu.memory_space<vmem>>, %arg5: memref<32x32xf32, #tpu.memory_space<vmem>>, %arg6: memref<1x32xf32, #tpu.memory_space<vmem>>, %arg7: memref<32x32xf32, #tpu.memory_space<vmem>>, %arg8: memref<1x32xf32, #tpu.memory_space<vmem>>, %arg9: memref<1x32xf32, #tpu.memory_space<vmem>>, %arg10: memref<1x32xf32, #tpu.memory_space<vmem>>, %arg11: memref<32x64xf32, #tpu.memory_space<vmem>>, %arg12: memref<1x64xf32, #tpu.memory_space<vmem>>, %arg13: memref<64x32xf32, #tpu.memory_space<vmem>>, %arg14: memref<1x32xf32, #tpu.memory_space<vmem>>, %arg15: memref<1x32xf32, #tpu.memory_space<vmem>>, %arg16: memref<1x32xf32, #tpu.memory_space<vmem>>, %arg17: memref<32x32xf32, #tpu.memory_space<vmem>>, %arg18: memref<1x32xf32, #tpu.memory_space<vmem>>, %arg19: memref<32x32xf32, #tpu.memory_space<vmem>>, %arg20: memref<1x32xf32, #tpu.memory_space<vmem>>, %arg21: memref<32x32xf32, #tpu.memory_space<vmem>>, %arg22: memref<32x32xf32, #tpu.memory_space<vmem>>, %arg23: memref<1x32xf32, #tpu.memory_space<vmem>>, %arg24: memref<8x128xf32, #tpu.memory_space<vmem>>) attributes {dimension_semantics = [], scalar_prefetch = 0 : i64, scratch_operands = 0 : i64, tpu.core_type = #tpu.core_type<tc>} {
    %c0 = arith.constant 0 : index
    %c0_0 = arith.constant 0 : index
    %0 = vector.load %arg0[%c0, %c0_0] : memref<16x32xf32, #tpu.memory_space<vmem>>, vector<16x32xf32>
    %c0_1 = arith.constant 0 : index
    %c0_2 = arith.constant 0 : index
    %1 = vector.load %arg1[%c0_1, %c0_2] : memref<32x32xf32, #tpu.memory_space<vmem>>, vector<32x32xf32>
    %c0_3 = arith.constant 0 : index
    %c0_4 = arith.constant 0 : index
    %2 = vector.load %arg2[%c0_3, %c0_4] : memref<1x32xf32, #tpu.memory_space<vmem>>, vector<1x32xf32>
    %cst = arith.constant dense<0.000000e+00> : vector<16x32xf32>
    %3 = tpu.matmul %0, %1, %cst {dimension_numbers = #tpu.dot_dimension_numbers<[1], [0], [0], [1], [0, 0, 1, 1], [], []>} : vector<16x32xf32>, vector<32x32xf32>, vector<16x32xf32> -> vector<16x32xf32>
    %4 = vector.broadcast %2 : vector<1x32xf32> to vector<16x32xf32>
    %5 = arith.addf %3, %4 : vector<16x32xf32>
    %c0_5 = arith.constant 0 : index
    %c0_6 = arith.constant 0 : index
    %6 = vector.load %arg3[%c0_5, %c0_6] : memref<32x32xf32, #tpu.memory_space<vmem>>, vector<32x32xf32>
    %c0_7 = arith.constant 0 : index
    %c0_8 = arith.constant 0 : index
    %7 = vector.load %arg4[%c0_7, %c0_8] : memref<1x32xf32, #tpu.memory_space<vmem>>, vector<1x32xf32>
    %cst_9 = arith.constant dense<0.000000e+00> : vector<16x32xf32>
    %8 = tpu.matmul %0, %6, %cst_9 {dimension_numbers = #tpu.dot_dimension_numbers<[1], [0], [0], [1], [0, 0, 1, 1], [], []>} : vector<16x32xf32>, vector<32x32xf32>, vector<16x32xf32> -> vector<16x32xf32>
    %9 = vector.broadcast %7 : vector<1x32xf32> to vector<16x32xf32>
    %10 = arith.addf %8, %9 : vector<16x32xf32>
    %c0_10 = arith.constant 0 : index
    %c0_11 = arith.constant 0 : index
    %11 = vector.load %arg5[%c0_10, %c0_11] : memref<32x32xf32, #tpu.memory_space<vmem>>, vector<32x32xf32>
    %c0_12 = arith.constant 0 : index
    %c0_13 = arith.constant 0 : index
    %12 = vector.load %arg6[%c0_12, %c0_13] : memref<1x32xf32, #tpu.memory_space<vmem>>, vector<1x32xf32>
    %cst_14 = arith.constant dense<0.000000e+00> : vector<16x32xf32>
    %13 = tpu.matmul %0, %11, %cst_14 {dimension_numbers = #tpu.dot_dimension_numbers<[1], [0], [0], [1], [0, 0, 1, 1], [], []>} : vector<16x32xf32>, vector<32x32xf32>, vector<16x32xf32> -> vector<16x32xf32>
    %14 = vector.broadcast %12 : vector<1x32xf32> to vector<16x32xf32>
    %15 = arith.addf %13, %14 : vector<16x32xf32>
    %16 = tpu.iota {dimensions = array<i32: 0>} : vector<16x16xi32>
    %17 = tpu.iota {dimensions = array<i32: 1>} : vector<16x16xi32>
    %c8_i32 = arith.constant 8 : i32
    %18 = vector.broadcast %c8_i32 : i32 to vector<16x16xi32>
    %19 = arith.cmpi slt, %16, %18 : vector<16x16xi32>
    %c8_i32_15 = arith.constant 8 : i32
    %20 = vector.broadcast %c8_i32_15 : i32 to vector<16x16xi32>
    %21 = arith.cmpi slt, %17, %20 : vector<16x16xi32>
    %22 = arith.xori %19, %21 : vector<16x16xi1>
    %cst_16 = arith.constant dense<true> : vector<16x16xi1>
    %23 = arith.xori %22, %cst_16 : vector<16x16xi1>
    %c0_17 = arith.constant 0 : index
    %c0_18 = arith.constant 0 : index
    %24 = vector.load %arg7[%c0_17, %c0_18] : memref<32x32xf32, #tpu.memory_space<vmem>>, vector<32x32xf32>
    %cst_19 = arith.constant 0.000000e+00 : f32
    %25 = vector.broadcast %cst_19 : f32 to vector<16x32xf32>
    %26 = vector.extract_strided_slice %5 {offsets = [0, 0], sizes = [16, 16], strides = [1, 1]} : vector<16x32xf32> to vector<16x16xf32>
    %27 = vector.extract_strided_slice %10 {offsets = [0, 0], sizes = [16, 16], strides = [1, 1]} : vector<16x32xf32> to vector<16x16xf32>
    %28 = vector.extract_strided_slice %15 {offsets = [0, 0], sizes = [16, 16], strides = [1, 1]} : vector<16x32xf32> to vector<16x16xf32>
    %cst_20 = arith.constant dense<0.000000e+00> : vector<16x16xf32>
    %29 = tpu.matmul %26, %27, %cst_20 {dimension_numbers = #tpu.dot_dimension_numbers<[1], [1], [0], [0], [0, 0, 1, 0], [], []>} : vector<16x16xf32>, vector<16x16xf32>, vector<16x16xf32> -> vector<16x16xf32>
    %cst_21 = arith.constant 2.500000e-01 : f32
    %30 = vector.broadcast %cst_21 : f32 to vector<16x16xf32>
    %31 = arith.mulf %29, %30 : vector<16x16xf32>
    %cst_22 = arith.constant -1.000000e+30 : f32
    %32 = vector.broadcast %cst_22 : f32 to vector<16x16xf32>
    %33 = arith.select %23, %31, %32 : vector<16x16xi1>, vector<16x16xf32>
    %cst_23 = arith.constant dense<0xFF800000> : vector<16xf32>
    %34 = vector.multi_reduction <maximumf>, %33, %cst_23 [1] : vector<16x16xf32> to vector<16xf32>
    %35 = vector.shape_cast %34 : vector<16xf32> to vector<16x1xf32>
    %36 = vector.broadcast %35 : vector<16x1xf32> to vector<16x16xf32>
    %37 = arith.subf %33, %36 : vector<16x16xf32>
    %38 = math.exp %37 : vector<16x16xf32>
    %cst_24 = arith.constant dense<0.000000e+00> : vector<16xf32>
    %39 = vector.multi_reduction <add>, %38, %cst_24 [1] : vector<16x16xf32> to vector<16xf32>
    %40 = vector.shape_cast %39 : vector<16xf32> to vector<16x1xf32>
    %41 = tpu.reciprocal %40 {approx = true} : vector<16x1xf32> -> vector<16x1xf32>
    %42 = vector.broadcast %41 : vector<16x1xf32> to vector<16x16xf32>
    %43 = arith.mulf %38, %42 : vector<16x16xf32>
    %cst_25 = arith.constant dense<0.000000e+00> : vector<16x16xf32>
    %44 = tpu.matmul %43, %28, %cst_25 {dimension_numbers = #tpu.dot_dimension_numbers<[1], [0], [0], [1], [0, 0, 1, 1], [], []>} : vector<16x16xf32>, vector<16x16xf32>, vector<16x16xf32> -> vector<16x16xf32>
    %45 = vector.extract_strided_slice %24 {offsets = [0, 0], sizes = [16, 32], strides = [1, 1]} : vector<32x32xf32> to vector<16x32xf32>
    %cst_26 = arith.constant dense<0.000000e+00> : vector<16x32xf32>
    %46 = tpu.matmul %44, %45, %cst_26 {dimension_numbers = #tpu.dot_dimension_numbers<[1], [0], [0], [1], [0, 0, 1, 1], [], []>} : vector<16x16xf32>, vector<16x32xf32>, vector<16x32xf32> -> vector<16x32xf32>
    %47 = arith.addf %25, %46 : vector<16x32xf32>
    %48 = vector.extract_strided_slice %5 {offsets = [0, 16], sizes = [16, 16], strides = [1, 1]} : vector<16x32xf32> to vector<16x16xf32>
    %49 = vector.extract_strided_slice %10 {offsets = [0, 16], sizes = [16, 16], strides = [1, 1]} : vector<16x32xf32> to vector<16x16xf32>
    %50 = vector.extract_strided_slice %15 {offsets = [0, 16], sizes = [16, 16], strides = [1, 1]} : vector<16x32xf32> to vector<16x16xf32>
    %cst_27 = arith.constant dense<0.000000e+00> : vector<16x16xf32>
    %51 = tpu.matmul %48, %49, %cst_27 {dimension_numbers = #tpu.dot_dimension_numbers<[1], [1], [0], [0], [0, 0, 1, 0], [], []>} : vector<16x16xf32>, vector<16x16xf32>, vector<16x16xf32> -> vector<16x16xf32>
    %cst_28 = arith.constant 2.500000e-01 : f32
    %52 = vector.broadcast %cst_28 : f32 to vector<16x16xf32>
    %53 = arith.mulf %51, %52 : vector<16x16xf32>
    %cst_29 = arith.constant -1.000000e+30 : f32
    %54 = vector.broadcast %cst_29 : f32 to vector<16x16xf32>
    %55 = arith.select %23, %53, %54 : vector<16x16xi1>, vector<16x16xf32>
    %cst_30 = arith.constant dense<0xFF800000> : vector<16xf32>
    %56 = vector.multi_reduction <maximumf>, %55, %cst_30 [1] : vector<16x16xf32> to vector<16xf32>
    %57 = vector.shape_cast %56 : vector<16xf32> to vector<16x1xf32>
    %58 = vector.broadcast %57 : vector<16x1xf32> to vector<16x16xf32>
    %59 = arith.subf %55, %58 : vector<16x16xf32>
    %60 = math.exp %59 : vector<16x16xf32>
    %cst_31 = arith.constant dense<0.000000e+00> : vector<16xf32>
    %61 = vector.multi_reduction <add>, %60, %cst_31 [1] : vector<16x16xf32> to vector<16xf32>
    %62 = vector.shape_cast %61 : vector<16xf32> to vector<16x1xf32>
    %63 = tpu.reciprocal %62 {approx = true} : vector<16x1xf32> -> vector<16x1xf32>
    %64 = vector.broadcast %63 : vector<16x1xf32> to vector<16x16xf32>
    %65 = arith.mulf %60, %64 : vector<16x16xf32>
    %cst_32 = arith.constant dense<0.000000e+00> : vector<16x16xf32>
    %66 = tpu.matmul %65, %50, %cst_32 {dimension_numbers = #tpu.dot_dimension_numbers<[1], [0], [0], [1], [0, 0, 1, 1], [], []>} : vector<16x16xf32>, vector<16x16xf32>, vector<16x16xf32> -> vector<16x16xf32>
    %67 = vector.extract_strided_slice %24 {offsets = [16, 0], sizes = [16, 32], strides = [1, 1]} : vector<32x32xf32> to vector<16x32xf32>
    %cst_33 = arith.constant dense<0.000000e+00> : vector<16x32xf32>
    %68 = tpu.matmul %66, %67, %cst_33 {dimension_numbers = #tpu.dot_dimension_numbers<[1], [0], [0], [1], [0, 0, 1, 1], [], []>} : vector<16x16xf32>, vector<16x32xf32>, vector<16x32xf32> -> vector<16x32xf32>
    %69 = arith.addf %47, %68 : vector<16x32xf32>
    %c0_34 = arith.constant 0 : index
    %c0_35 = arith.constant 0 : index
    %70 = vector.load %arg8[%c0_34, %c0_35] : memref<1x32xf32, #tpu.memory_space<vmem>>, vector<1x32xf32>
    %71 = vector.broadcast %70 : vector<1x32xf32> to vector<16x32xf32>
    %72 = arith.addf %69, %71 : vector<16x32xf32>
    %73 = arith.addf %0, %72 : vector<16x32xf32>
    %c0_36 = arith.constant 0 : index
    %c0_37 = arith.constant 0 : index
    %74 = vector.load %arg9[%c0_36, %c0_37] : memref<1x32xf32, #tpu.memory_space<vmem>>, vector<1x32xf32>
    %c0_38 = arith.constant 0 : index
    %c0_39 = arith.constant 0 : index
    %75 = vector.load %arg10[%c0_38, %c0_39] : memref<1x32xf32, #tpu.memory_space<vmem>>, vector<1x32xf32>
    %cst_40 = arith.constant dense<0.000000e+00> : vector<16xf32>
    %76 = vector.multi_reduction <add>, %73, %cst_40 [1] : vector<16x32xf32> to vector<16xf32>
    %77 = vector.shape_cast %76 : vector<16xf32> to vector<16x1xf32>
    %cst_41 = arith.constant 3.200000e+01 : f32
    %78 = vector.broadcast %cst_41 : f32 to vector<16x1xf32>
    %79 = arith.divf %77, %78 : vector<16x1xf32>
    %80 = vector.broadcast %79 : vector<16x1xf32> to vector<16x32xf32>
    %81 = arith.subf %73, %80 : vector<16x32xf32>
    %82 = arith.mulf %81, %81 : vector<16x32xf32>
    %cst_42 = arith.constant dense<0.000000e+00> : vector<16xf32>
    %83 = vector.multi_reduction <add>, %82, %cst_42 [1] : vector<16x32xf32> to vector<16xf32>
    %84 = vector.shape_cast %83 : vector<16xf32> to vector<16x1xf32>
    %cst_43 = arith.constant 3.200000e+01 : f32
    %85 = vector.broadcast %cst_43 : f32 to vector<16x1xf32>
    %86 = arith.divf %84, %85 : vector<16x1xf32>
    %87 = vector.broadcast %79 : vector<16x1xf32> to vector<16x32xf32>
    %88 = arith.subf %73, %87 : vector<16x32xf32>
    %cst_44 = arith.constant 9.99999974E-6 : f32
    %89 = vector.broadcast %cst_44 : f32 to vector<16x1xf32>
    %90 = arith.addf %86, %89 : vector<16x1xf32>
    %91 = math.rsqrt %90 : vector<16x1xf32>
    %92 = vector.broadcast %91 : vector<16x1xf32> to vector<16x32xf32>
    %93 = arith.mulf %88, %92 : vector<16x32xf32>
    %94 = vector.broadcast %74 : vector<1x32xf32> to vector<16x32xf32>
    %95 = arith.mulf %93, %94 : vector<16x32xf32>
    %96 = vector.broadcast %75 : vector<1x32xf32> to vector<16x32xf32>
    %97 = arith.addf %95, %96 : vector<16x32xf32>
    %c0_45 = arith.constant 0 : index
    %c0_46 = arith.constant 0 : index
    %98 = vector.load %arg11[%c0_45, %c0_46] : memref<32x64xf32, #tpu.memory_space<vmem>>, vector<32x64xf32>
    %c0_47 = arith.constant 0 : index
    %c0_48 = arith.constant 0 : index
    %99 = vector.load %arg12[%c0_47, %c0_48] : memref<1x64xf32, #tpu.memory_space<vmem>>, vector<1x64xf32>
    %cst_49 = arith.constant dense<0.000000e+00> : vector<16x64xf32>
    %100 = tpu.matmul %97, %98, %cst_49 {dimension_numbers = #tpu.dot_dimension_numbers<[1], [0], [0], [1], [0, 0, 1, 1], [], []>} : vector<16x32xf32>, vector<32x64xf32>, vector<16x64xf32> -> vector<16x64xf32>
    %101 = vector.broadcast %99 : vector<1x64xf32> to vector<16x64xf32>
    %102 = arith.addf %100, %101 : vector<16x64xf32>
    %cst_50 = arith.constant 0.000000e+00 : f32
    %103 = vector.broadcast %cst_50 : f32 to vector<16x64xf32>
    %104 = arith.maximumf %102, %103 : vector<16x64xf32>
    %c0_51 = arith.constant 0 : index
    %c0_52 = arith.constant 0 : index
    %105 = vector.load %arg13[%c0_51, %c0_52] : memref<64x32xf32, #tpu.memory_space<vmem>>, vector<64x32xf32>
    %c0_53 = arith.constant 0 : index
    %c0_54 = arith.constant 0 : index
    %106 = vector.load %arg14[%c0_53, %c0_54] : memref<1x32xf32, #tpu.memory_space<vmem>>, vector<1x32xf32>
    %cst_55 = arith.constant dense<0.000000e+00> : vector<16x32xf32>
    %107 = tpu.matmul %104, %105, %cst_55 {dimension_numbers = #tpu.dot_dimension_numbers<[1], [0], [0], [1], [0, 0, 1, 1], [], []>} : vector<16x64xf32>, vector<64x32xf32>, vector<16x32xf32> -> vector<16x32xf32>
    %108 = vector.broadcast %106 : vector<1x32xf32> to vector<16x32xf32>
    %109 = arith.addf %107, %108 : vector<16x32xf32>
    %110 = arith.addf %97, %109 : vector<16x32xf32>
    %c0_56 = arith.constant 0 : index
    %c0_57 = arith.constant 0 : index
    %111 = vector.load %arg15[%c0_56, %c0_57] : memref<1x32xf32, #tpu.memory_space<vmem>>, vector<1x32xf32>
    %c0_58 = arith.constant 0 : index
    %c0_59 = arith.constant 0 : index
    %112 = vector.load %arg16[%c0_58, %c0_59] : memref<1x32xf32, #tpu.memory_space<vmem>>, vector<1x32xf32>
    %cst_60 = arith.constant dense<0.000000e+00> : vector<16xf32>
    %113 = vector.multi_reduction <add>, %110, %cst_60 [1] : vector<16x32xf32> to vector<16xf32>
    %114 = vector.shape_cast %113 : vector<16xf32> to vector<16x1xf32>
    %cst_61 = arith.constant 3.200000e+01 : f32
    %115 = vector.broadcast %cst_61 : f32 to vector<16x1xf32>
    %116 = arith.divf %114, %115 : vector<16x1xf32>
    %117 = vector.broadcast %116 : vector<16x1xf32> to vector<16x32xf32>
    %118 = arith.subf %110, %117 : vector<16x32xf32>
    %119 = arith.mulf %118, %118 : vector<16x32xf32>
    %cst_62 = arith.constant dense<0.000000e+00> : vector<16xf32>
    %120 = vector.multi_reduction <add>, %119, %cst_62 [1] : vector<16x32xf32> to vector<16xf32>
    %121 = vector.shape_cast %120 : vector<16xf32> to vector<16x1xf32>
    %cst_63 = arith.constant 3.200000e+01 : f32
    %122 = vector.broadcast %cst_63 : f32 to vector<16x1xf32>
    %123 = arith.divf %121, %122 : vector<16x1xf32>
    %124 = vector.broadcast %116 : vector<16x1xf32> to vector<16x32xf32>
    %125 = arith.subf %110, %124 : vector<16x32xf32>
    %cst_64 = arith.constant 9.99999974E-6 : f32
    %126 = vector.broadcast %cst_64 : f32 to vector<16x1xf32>
    %127 = arith.addf %123, %126 : vector<16x1xf32>
    %128 = math.rsqrt %127 : vector<16x1xf32>
    %129 = vector.broadcast %128 : vector<16x1xf32> to vector<16x32xf32>
    %130 = arith.mulf %125, %129 : vector<16x32xf32>
    %131 = vector.broadcast %111 : vector<1x32xf32> to vector<16x32xf32>
    %132 = arith.mulf %130, %131 : vector<16x32xf32>
    %133 = vector.broadcast %112 : vector<1x32xf32> to vector<16x32xf32>
    %134 = arith.addf %132, %133 : vector<16x32xf32>
    %c0_65 = arith.constant 0 : index
    %c0_66 = arith.constant 0 : index
    %135 = vector.load %arg17[%c0_65, %c0_66] : memref<32x32xf32, #tpu.memory_space<vmem>>, vector<32x32xf32>
    %c0_67 = arith.constant 0 : index
    %c0_68 = arith.constant 0 : index
    %136 = vector.load %arg18[%c0_67, %c0_68] : memref<1x32xf32, #tpu.memory_space<vmem>>, vector<1x32xf32>
    %cst_69 = arith.constant dense<0.000000e+00> : vector<16x32xf32>
    %137 = tpu.matmul %134, %135, %cst_69 {dimension_numbers = #tpu.dot_dimension_numbers<[1], [0], [0], [1], [0, 0, 1, 1], [], []>} : vector<16x32xf32>, vector<32x32xf32>, vector<16x32xf32> -> vector<16x32xf32>
    %138 = vector.broadcast %136 : vector<1x32xf32> to vector<16x32xf32>
    %139 = arith.addf %137, %138 : vector<16x32xf32>
    %c0_70 = arith.constant 0 : index
    %c0_71 = arith.constant 0 : index
    %140 = vector.load %arg19[%c0_70, %c0_71] : memref<32x32xf32, #tpu.memory_space<vmem>>, vector<32x32xf32>
    %c0_72 = arith.constant 0 : index
    %c0_73 = arith.constant 0 : index
    %141 = vector.load %arg20[%c0_72, %c0_73] : memref<1x32xf32, #tpu.memory_space<vmem>>, vector<1x32xf32>
    %cst_74 = arith.constant dense<0.000000e+00> : vector<16x32xf32>
    %142 = tpu.matmul %134, %140, %cst_74 {dimension_numbers = #tpu.dot_dimension_numbers<[1], [0], [0], [1], [0, 0, 1, 1], [], []>} : vector<16x32xf32>, vector<32x32xf32>, vector<16x32xf32> -> vector<16x32xf32>
    %143 = vector.broadcast %141 : vector<1x32xf32> to vector<16x32xf32>
    %144 = arith.addf %142, %143 : vector<16x32xf32>
    %c0_75 = arith.constant 0 : index
    %c0_76 = arith.constant 0 : index
    %145 = vector.load %arg21[%c0_75, %c0_76] : memref<32x32xf32, #tpu.memory_space<vmem>>, vector<32x32xf32>
    %cst_77 = arith.constant dense<0.000000e+00> : vector<16x32xf32>
    %146 = tpu.matmul %144, %145, %cst_77 {dimension_numbers = #tpu.dot_dimension_numbers<[1], [0], [0], [1], [0, 0, 1, 1], [], []>} : vector<16x32xf32>, vector<32x32xf32>, vector<16x32xf32> -> vector<16x32xf32>
    %c0_78 = arith.constant 0 : index
    %c0_79 = arith.constant 0 : index
    %147 = vector.load %arg22[%c0_78, %c0_79] : memref<32x32xf32, #tpu.memory_space<vmem>>, vector<32x32xf32>
    %cst_80 = arith.constant dense<0.000000e+00> : vector<16x32xf32>
    %148 = tpu.matmul %139, %147, %cst_80 {dimension_numbers = #tpu.dot_dimension_numbers<[1], [0], [0], [1], [0, 0, 1, 1], [], []>} : vector<16x32xf32>, vector<32x32xf32>, vector<16x32xf32> -> vector<16x32xf32>
    %c0_81 = arith.constant 0 : index
    %c0_82 = arith.constant 0 : index
    %149 = vector.load %arg23[%c0_81, %c0_82] : memref<1x32xf32, #tpu.memory_space<vmem>>, vector<1x32xf32>
    %150 = vector.extract_strided_slice %146 {offsets = [0, 0], sizes = [8, 32], strides = [1, 1]} : vector<16x32xf32> to vector<8x32xf32>
    %151 = vector.extract_strided_slice %146 {offsets = [8, 0], sizes = [8, 32], strides = [1, 1]} : vector<16x32xf32> to vector<8x32xf32>
    %152 = vector.extract_strided_slice %148 {offsets = [0, 0], sizes = [8, 32], strides = [1, 1]} : vector<16x32xf32> to vector<8x32xf32>
    %153 = vector.extract_strided_slice %148 {offsets = [8, 0], sizes = [8, 32], strides = [1, 1]} : vector<16x32xf32> to vector<8x32xf32>
    %154 = arith.addf %150, %152 : vector<8x32xf32>
    %155 = vector.broadcast %149 : vector<1x32xf32> to vector<8x32xf32>
    %156 = arith.addf %154, %155 : vector<8x32xf32>
    %157 = arith.addf %151, %153 : vector<8x32xf32>
    %158 = vector.broadcast %149 : vector<1x32xf32> to vector<8x32xf32>
    %159 = arith.addf %157, %158 : vector<8x32xf32>
    %160 = arith.addf %151, %152 : vector<8x32xf32>
    %161 = vector.broadcast %149 : vector<1x32xf32> to vector<8x32xf32>
    %162 = arith.addf %160, %161 : vector<8x32xf32>
    %163 = arith.addf %150, %153 : vector<8x32xf32>
    %164 = vector.broadcast %149 : vector<1x32xf32> to vector<8x32xf32>
    %165 = arith.addf %163, %164 : vector<8x32xf32>
    %166 = tpu.concatenate %156, %159, %162, %165 in 1 : vector<8x32xf32>, vector<8x32xf32>, vector<8x32xf32>, vector<8x32xf32> -> vector<8x128xf32>
    %c0_83 = arith.constant 0 : index
    %c0_84 = arith.constant 0 : index
    %167 = vector.load %arg24[%c0_83, %c0_84] : memref<8x128xf32, #tpu.memory_space<vmem>>, vector<8x128xf32>
    tpu.vector_store %arg24[%c0_83, %c0_84], %166 {strides = array<i32>} : memref<8x128xf32, #tpu.memory_space<vmem>>, vector<8x128xf32>,
    return
  }
}

</mosaic_0001>

<llo_original>
// kernel: switchtab_forward.1
$region0: #{switchtab_forward.1}
  #allocation0 [shape = 'u32[]', space=smem, size = 0x4, offset = 0x4, fixed_abs, tag = 'smem constant byte address 0x4 - core index']
  #allocation1 [shape = 'u32[144,128]{1,0:T(1,128)}', space=vmem, size = 0x12000, scoped, tag = 'internal scratch']
  %s0 = inlined_call_operand.vmem [shape: f32[16,32], index: 0, kind: input, shape index: {}]
  %s1 = inlined_call_operand.vmem [shape: f32[32,32], index: 1, kind: input, shape index: {}]
  %s2 = inlined_call_operand.hbm [shape: f32[1,32], index: 2, kind: input, shape index: {}]
  %s3 = inlined_call_operand.vmem [shape: f32[32,32], index: 3, kind: input, shape index: {}]
  %s4 = inlined_call_operand.hbm [shape: f32[1,32], index: 4, kind: input, shape index: {}]
  %s5 = inlined_call_operand.vmem [shape: f32[32,32], index: 5, kind: input, shape index: {}]
  %s6 = inlined_call_operand.hbm [shape: f32[1,32], index: 6, kind: input, shape index: {}]
  %s7 = inlined_call_operand.vmem [shape: f32[32,32], index: 7, kind: input, shape index: {}]
  %s8 = inlined_call_operand.hbm [shape: f32[1,32], index: 8, kind: input, shape index: {}]
  %s9 = inlined_call_operand.hbm [shape: f32[1,32], index: 9, kind: input, shape index: {}]
  %s10 = inlined_call_operand.hbm [shape: f32[1,32], index: 10, kind: input, shape index: {}]
  %s11 = inlined_call_operand.hbm [shape: f32[32,64], index: 11, kind: input, shape index: {}]
  %s12 = inlined_call_operand.hbm [shape: f32[1,64], index: 12, kind: input, shape index: {}]
  %s13 = inlined_call_operand.vmem [shape: f32[64,32], index: 13, kind: input, shape index: {}]
  %s14 = inlined_call_operand.hbm [shape: f32[1,32], index: 14, kind: input, shape index: {}]
  %s15 = inlined_call_operand.hbm [shape: f32[1,32], index: 15, kind: input, shape index: {}]
  %s16 = inlined_call_operand.hbm [shape: f32[1,32], index: 16, kind: input, shape index: {}]
  %s17 = inlined_call_operand.vmem [shape: f32[32,32], index: 17, kind: input, shape index: {}]
  %s18 = inlined_call_operand.vmem [shape: f32[1,32], index: 18, kind: input, shape index: {}]
  %s19 = inlined_call_operand.hbm [shape: f32[32,32], index: 19, kind: input, shape index: {}]
  %s20 = inlined_call_operand.vmem [shape: f32[1,32], index: 20, kind: input, shape index: {}]
  %s21 = inlined_call_operand.hbm [shape: f32[32,32], index: 21, kind: input, shape index: {}]
  %s22 = inlined_call_operand.hbm [shape: f32[32,32], index: 22, kind: input, shape index: {}]
  %s23 = inlined_call_operand.vmem [shape: f32[1,32], index: 23, kind: input, shape index: {}]
  %s24 = inlined_call_operand.vmem [shape: f32[8,128], index: 24, kind: output, shape index: {}]
  %s25 = sld [smem:[#allocation0]]
  $region162: #{switchtab_forward.1} parent=0
    _
  %s27 = ssub.s32 1, %s25
  %s28 = scalar_select 0, %s27, %s25
  $region1: #{switchtab_forward.1} parent=0
    #allocation2 [shape = 'u8[512]{0}', space=vmem, size = 0x400, scoped, tag = 'input window, operand 2, single buffered']
    #allocation3 [shape = 's32[1]{0}', space=sflag, size = 0x4, scoped, tag = 'scoped memory for switchtab_forward.1']
    #allocation4 [shape = 'u8[512]{0}', space=vmem, size = 0x400, scoped, tag = 'input window, operand 4, single buffered']
    #allocation5 [shape = 's32[1]{0}', space=sflag, size = 0x4, scoped, tag = 'scoped memory for switchtab_forward.1']
    #allocation6 [shape = 'u8[512]{0}', space=vmem, size = 0x400, scoped, tag = 'input window, operand 6, single buffered']
    #allocation7 [shape = 'u8[512]{0}', space=vmem, size = 0x400, scoped, tag = 'input window, operand 8, single buffered']
    #allocation8 [shape = 's32[1]{0}', space=sflag, size = 0x4, scoped, tag = 'scoped memory for switchtab_forward.1']
    #allocation9 [shape = 'u8[512]{0}', space=vmem, size = 0x400, scoped, tag = 'input window, operand 9, single buffered']
    #allocation10 [shape = 'u8[512]{0}', space=vmem, size = 0x400, scoped, tag = 'input window, operand 10, single buffered']
    #allocation11 [shape = 's32[1]{0}', space=sflag, size = 0x4, scoped, tag = 'scoped memory for switchtab_forward.1']
    #allocation12 [shape = 'u8[16384]{0}', space=vmem, size = 0x4000, scoped, tag = 'input window, operand 11, single buffered']
    #allocation13 [shape = 'u8[512]{0}', space=vmem, size = 0x400, scoped, tag = 'input window, operand 12, single buffered']
    #allocation14 [shape = 's32[1]{0}', space=sflag, size = 0x4, scoped, tag = 'scoped memory for switchtab_forward.1']
    #allocation15 [shape = 'u8[512]{0}', space=vmem, size = 0x400, scoped, tag = 'input window, operand 14, single buffered']
    #allocation16 [shape = 'u8[512]{0}', space=vmem, size = 0x400, scoped, tag = 'input window, operand 15, single buffered']
    #allocation17 [shape = 's32[1]{0}', space=sflag, size = 0x4, scoped, tag = 'scoped memory for switchtab_forward.1']
    #allocation18 [shape = 'u8[512]{0}', space=vmem, size = 0x400, scoped, tag = 'input window, operand 16, single buffered']
    #allocation19 [shape = 'u8[16384]{0}', space=vmem, size = 0x4000, scoped, tag = 'input window, operand 19, single buffered']
    #allocation20 [shape = 's32[1]{0}', space=sflag, size = 0x4, scoped, tag = 'scoped memory for switchtab_forward.1']
    #allocation21 [shape = 'u8[16384]{0}', space=vmem, size = 0x4000, scoped, tag = 'input window, operand 21, single buffered']
    #allocation22 [shape = 'u8[16384]{0}', space=vmem, size = 0x4000, scoped, tag = 'input window, operand 22, single buffered']
    #allocation23 [shape = 's32[1]{0}', space=sflag, size = 0x4, scoped, tag = 'scoped memory for switchtab_forward.1']
    %29 = vsyncpa [#allocation3], 0
    %30 = vsyncpa [#allocation5], 0
    %31 = vsyncpa [#allocation8], 0
    %32 = vsyncpa [#allocation11], 0
    %33 = vsyncpa [#allocation14], 0
    %34 = vsyncpa [#allocation17], 0
    %35 = vsyncpa [#allocation20], 0
    %36 = vsyncpa [#allocation23], 0
    // Predicated region
    $region2: #{switchtab_forward.1} parent=1 // pred_check
      _
    $region3: #{switchtab_forward.1} parent=1 // pred_check_branch
      %38 = sbr.rel (0) target = $region5
    $region4: #{switchtab_forward.1} parent=1 // pred_region
      _
    $region5: #{switchtab_forward.1} parent=1 // pred_fallthru
      _
    // Predicated region
    $region6: #{switchtab_forward.1} parent=1 // pred_check
      _
    $region7: #{switchtab_forward.1} parent=1 // pred_check_branch
      %40 = sbr.rel (0) target = $region9
    $region8: #{switchtab_forward.1} parent=1 // pred_region
      _
    $region9: #{switchtab_forward.1} parent=1 // pred_fallthru
      _
    // Predicated region
    $region10: #{switchtab_forward.1} parent=1 // pred_check
      _
    $region11: #{switchtab_forward.1} parent=1 // pred_check_branch
      %42 = sbr.rel (0) target = $region13
    $region12: #{switchtab_forward.1} parent=1 // pred_region
      %s44 = ssub.s32 16, 16
      %45 = vsyncadd [#allocation3], %s44
      %s47 = sshll.u32 [#allocation2], 4
      %s48 = int_to_ptr.vmem [resolvable:$true] %s47
      %50 = dma.hbm_to_vmem [thread:$0]  %s2, 16, %s48, [#allocation3]
    $region13: #{switchtab_forward.1} parent=1 // pred_fallthru
      _
    // Predicated region
    $region14: #{switchtab_forward.1} parent=1 // pred_check
      _
    $region15: #{switchtab_forward.1} parent=1 // pred_check_branch
      %52 = sbr.rel (0) target = $region17
    $region16: #{switchtab_forward.1} parent=1 // pred_region
      _
    $region17: #{switchtab_forward.1} parent=1 // pred_fallthru
      _
    // Predicated region
    $region18: #{switchtab_forward.1} parent=1 // pred_check
      _
    $region19: #{switchtab_forward.1} parent=1 // pred_check_branch
      %54 = sbr.rel (0) target = $region21
    $region20: #{switchtab_forward.1} parent=1 // pred_region
      %s56 = ssub.s32 16, 16
      %57 = vsyncadd [#allocation5], %s56
      %s59 = sshll.u32 [#allocation4], 4
      %s60 = int_to_ptr.vmem [resolvable:$true] %s59
      %62 = dma.hbm_to_vmem [thread:$0]  %s4, 16, %s60, [#allocation5]
    $region21: #{switchtab_forward.1} parent=1 // pred_fallthru
      _
    // Predicated region
    $region22: #{switchtab_forward.1} parent=1 // pred_check
      _
    $region23: #{switchtab_forward.1} parent=1 // pred_check_branch
      %64 = sbr.rel (0) target = $region25
    $region24: #{switchtab_forward.1} parent=1 // pred_region
      _
    $region25: #{switchtab_forward.1} parent=1 // pred_fallthru
      _
    // Predicated region
    $region26: #{switchtab_forward.1} parent=1 // pred_check
      _
    $region27: #{switchtab_forward.1} parent=1 // pred_check_branch
      %66 = sbr.rel (0) target = $region29
    $region28: #{switchtab_forward.1} parent=1 // pred_region
      %s68 = ssub.s32 16, 16
      %69 = vsyncadd [#allocation5], %s68
      %s71 = sshll.u32 [#allocation6], 4
      %s72 = int_to_ptr.vmem [resolvable:$true] %s71
      %74 = dma.hbm_to_vmem [thread:$0]  %s6, 16, %s72, [#allocation5]
    $region29: #{switchtab_forward.1} parent=1 // pred_fallthru
      _
    // Predicated region
    $region30: #{switchtab_forward.1} parent=1 // pred_check
      _
    $region31: #{switchtab_forward.1} parent=1 // pred_check_branch
      %76 = sbr.rel (0) target = $region33
    $region32: #{switchtab_forward.1} parent=1 // pred_region
      _
    $region33: #{switchtab_forward.1} parent=1 // pred_fallthru
      _
    // Predicated region
    $region34: #{switchtab_forward.1} parent=1 // pred_check
      _
    $region35: #{switchtab_forward.1} parent=1 // pred_check_branch
      %78 = sbr.rel (0) target = $region37
    $region36: #{switchtab_forward.1} parent=1 // pred_region
      %s80 = ssub.s32 16, 16
      %81 = vsyncadd [#allocation8], %s80
      %s83 = sshll.u32 [#allocation7], 4
      %s84 = int_to_ptr.vmem [resolvable:$true] %s83
      %86 = dma.hbm_to_vmem [thread:$0]  %s8, 16, %s84, [#allocation8]
    $region37: #{switchtab_forward.1} parent=1 // pred_fallthru
      _
    // Predicated region
    $region38: #{switchtab_forward.1} parent=1 // pred_check
      _
    $region39: #{switchtab_forward.1} parent=1 // pred_check_branch
      %88 = sbr.rel (0) target = $region41
    $region40: #{switchtab_forward.1} parent=1 // pred_region
      %s90 = ssub.s32 16, 16
      %91 = vsyncadd [#allocation8], %s90
      %s93 = sshll.u32 [#allocation9], 4
      %s94 = int_to_ptr.vmem [resolvable:$true] %s93
      %96 = dma.hbm_to_vmem [thread:$0]  %s9, 16, %s94, [#allocation8]
    $region41: #{switchtab_forward.1} parent=1 // pred_fallthru
      _
    // Predicated region
    $region42: #{switchtab_forward.1} parent=1 // pred_check
      _
    $region43: #{switchtab_forward.1} parent=1 // pred_check_branch
      %98 = sbr.rel (0) target = $region45
    $region44: #{switchtab_forward.1} parent=1 // pred_region
      %s100 = ssub.s32 16, 16
      %101 = vsyncadd [#allocation11], %s100
      %s103 = sshll.u32 [#allocation10], 4
      %s104 = int_to_ptr.vmem [resolvable:$true] %s103
      %106 = dma.hbm_to_vmem [thread:$0]  %s10, 16, %s104, [#allocation11]
    $region45: #{switchtab_forward.1} parent=1 // pred_fallthru
      _
    // Predicated region
    $region46: #{switchtab_forward.1} parent=1 // pred_check
      _
    $region47: #{switchtab_forward.1} parent=1 // pred_check_branch
      %108 = sbr.rel (0) target = $region49
    $region48: #{switchtab_forward.1} parent=1 // pred_region
      %s110 = ssub.s32 512, 512
      %111 = vsyncadd [#allocation11], %s110
      %s112 = sshll.u32 [#allocation12], 4
      %s113 = int_to_ptr.vmem [resolvable:$true] %s112
      %118 = dma.hbm_to_vmem [thread:$0]  %s11, 512, %s113, [#allocation11], 128, 128, 8
    $region49: #{switchtab_forward.1} parent=1 // pred_fallthru
      _
    // Predicated region
    $region50: #{switchtab_forward.1} parent=1 // pred_check
      _
    $region51: #{switchtab_forward.1} parent=1 // pred_check_branch
      %120 = sbr.rel (0) target = $region53
    $region52: #{switchtab_forward.1} parent=1 // pred_region
      %s122 = ssub.s32 16, 16
      %123 = vsyncadd [#allocation14], %s122
      %s125 = sshll.u32 [#allocation13], 4
      %s126 = int_to_ptr.vmem [resolvable:$true] %s125
      %128 = dma.hbm_to_vmem [thread:$0]  %s12, 16, %s126, [#allocation14]
    $region53: #{switchtab_forward.1} parent=1 // pred_fallthru
      _
    // Predicated region
    $region54: #{switchtab_forward.1} parent=1 // pred_check
      _
    $region55: #{switchtab_forward.1} parent=1 // pred_check_branch
      %130 = sbr.rel (0) target = $region57
    $region56: #{switchtab_forward.1} parent=1 // pred_region
      _
    $region57: #{switchtab_forward.1} parent=1 // pred_fallthru
      _
    // Predicated region
    $region58: #{switchtab_forward.1} parent=1 // pred_check
      _
    $region59: #{switchtab_forward.1} parent=1 // pred_check_branch
      %132 = sbr.rel (0) target = $region61
    $region60: #{switchtab_forward.1} parent=1 // pred_region
      %s134 = ssub.s32 16, 16
      %135 = vsyncadd [#allocation14], %s134
      %s137 = sshll.u32 [#allocation15], 4
      %s138 = int_to_ptr.vmem [resolvable:$true] %s137
      %140 = dma.hbm_to_vmem [thread:$0]  %s14, 16, %s138, [#allocation14]
    $region61: #{switchtab_forward.1} parent=1 // pred_fallthru
      _
    // Predicated region
    $region62: #{switchtab_forward.1} parent=1 // pred_check
      _
    $region63: #{switchtab_forward.1} parent=1 // pred_check_branch
      %142 = sbr.rel (0) target = $region65
    $region64: #{switchtab_forward.1} parent=1 // pred_region
      %s144 = ssub.s32 16, 16
      %145 = vsyncadd [#allocation17], %s144
      %s147 = sshll.u32 [#allocation16], 4
      %s148 = int_to_ptr.vmem [resolvable:$true] %s147
      %150 = dma.hbm_to_vmem [thread:$0]  %s15, 16, %s148, [#allocation17]
    $region65: #{switchtab_forward.1} parent=1 // pred_fallthru
      _
    // Predicated region
    $region66: #{switchtab_forward.1} parent=1 // pred_check
      _
    $region67: #{switchtab_forward.1} parent=1 // pred_check_branch
      %152 = sbr.rel (0) target = $region69
    $region68: #{switchtab_forward.1} parent=1 // pred_region
      %s154 = ssub.s32 16, 16
      %155 = vsyncadd [#allocation17], %s154
      %s157 = sshll.u32 [#allocation18], 4
      %s158 = int_to_ptr.vmem [resolvable:$true] %s157
      %160 = dma.hbm_to_vmem [thread:$0]  %s16, 16, %s158, [#allocation17]
    $region69: #{switchtab_forward.1} parent=1 // pred_fallthru
      _
    // Predicated region
    $region70: #{switchtab_forward.1} parent=1 // pred_check
      _
    $region71: #{switchtab_forward.1} parent=1 // pred_check_branch
      %162 = sbr.rel (0) target = $region73
    $region72: #{switchtab_forward.1} parent=1 // pred_region
      _
    $region73: #{switchtab_forward.1} parent=1 // pred_fallthru
      _
    // Predicated region
    $region74: #{switchtab_forward.1} parent=1 // pred_check
      _
    $region75: #{switchtab_forward.1} parent=1 // pred_check_branch
      %164 = sbr.rel (0) target = $region77
    $region76: #{switchtab_forward.1} parent=1 // pred_region
      _
    $region77: #{switchtab_forward.1} parent=1 // pred_fallthru
      _
    // Predicated region
    $region78: #{switchtab_forward.1} parent=1 // pred_check
      _
    $region79: #{switchtab_forward.1} parent=1 // pred_check_branch
      %166 = sbr.rel (0) target = $region81
    $region80: #{switchtab_forward.1} parent=1 // pred_region
      %s168 = ssub.s32 512, 512
      %169 = vsyncadd [#allocation20], %s168
      %s170 = sshll.u32 [#allocation19], 4
      %s171 = int_to_ptr.vmem [resolvable:$true] %s170
      %176 = dma.hbm_to_vmem [thread:$0]  %s19, 512, %s171, [#allocation20], 128, 128, 8
    $region81: #{switchtab_forward.1} parent=1 // pred_fallthru
      _
    // Predicated region
    $region82: #{switchtab_forward.1} parent=1 // pred_check
      _
    $region83: #{switchtab_forward.1} parent=1 // pred_check_branch
      %178 = sbr.rel (0) target = $region85
    $region84: #{switchtab_forward.1} parent=1 // pred_region
      _
    $region85: #{switchtab_forward.1} parent=1 // pred_fallthru
      _
    // Predicated region
    $region86: #{switchtab_forward.1} parent=1 // pred_check
      _
    $region87: #{switchtab_forward.1} parent=1 // pred_check_branch
      %180 = sbr.rel (0) target = $region89
    $region88: #{switchtab_forward.1} parent=1 // pred_region
      %s182 = ssub.s32 512, 512
      %183 = vsyncadd [#allocation20], %s182
      %s184 = sshll.u32 [#allocation21], 4
      %s185 = int_to_ptr.vmem [resolvable:$true] %s184
      %190 = dma.hbm_to_vmem [thread:$0]  %s21, 512, %s185, [#allocation20], 128, 128, 8
    $region89: #{switchtab_forward.1} parent=1 // pred_fallthru
      _
    // Predicated region
    $region90: #{switchtab_forward.1} parent=1 // pred_check
      _
    $region91: #{switchtab_forward.1} parent=1 // pred_check_branch
      %192 = sbr.rel (0) target = $region93
    $region92: #{switchtab_forward.1} parent=1 // pred_region
      %s194 = ssub.s32 512, 512
      %195 = vsyncadd [#allocation23], %s194
      %s196 = sshll.u32 [#allocation22], 4
      %s197 = int_to_ptr.vmem [resolvable:$true] %s196
      %202 = dma.hbm_to_vmem [thread:$0]  %s22, 512, %s197, [#allocation23], 128, 128, 8
    $region93: #{switchtab_forward.1} parent=1 // pred_fallthru
      _
    // Predicated region
    $region94: #{switchtab_forward.1} parent=1 // pred_check
      _
    $region95: #{switchtab_forward.1} parent=1 // pred_check_branch
      %204 = sbr.rel (0) target = $region97
    $region96: #{switchtab_forward.1} parent=1 // pred_region
      _
    $region97: #{switchtab_forward.1} parent=1 // pred_fallthru
      _
    // Predicated region
    $region98: #{switchtab_forward.1} parent=1 // pred_check
      _
    $region99: #{switchtab_forward.1} parent=1 // pred_check_branch
      %206 = sbr.rel (0) target = $region101
    $region100: #{switchtab_forward.1} parent=1 // pred_region
      %207 = dma.done [#allocation3], 16
    $region101: #{switchtab_forward.1} parent=1 // pred_fallthru
      _
    // Predicated region
    $region102: #{switchtab_forward.1} parent=1 // pred_check
      _
    $region103: #{switchtab_forward.1} parent=1 // pred_check_branch
      %209 = sbr.rel (0) target = $region105
    $region104: #{switchtab_forward.1} parent=1 // pred_region
      %210 = dma.done [#allocation5], 16
    $region105: #{switchtab_forward.1} parent=1 // pred_fallthru
      _
    // Predicated region
    $region106: #{switchtab_forward.1} parent=1 // pred_check
      _
    $region107: #{switchtab_forward.1} parent=1 // pred_check_branch
      %212 = sbr.rel (0) target = $region109
    $region108: #{switchtab_forward.1} parent=1 // pred_region
      %213 = dma.done [#allocation5], 16
    $region109: #{switchtab_forward.1} parent=1 // pred_fallthru
      _
    // Predicated region
    $region110: #{switchtab_forward.1} parent=1 // pred_check
      _
    $region111: #{switchtab_forward.1} parent=1 // pred_check_branch
      %215 = sbr.rel (0) target = $region113
    $region112: #{switchtab_forward.1} parent=1 // pred_region
      %216 = dma.done [#allocation8], 16
    $region113: #{switchtab_forward.1} parent=1 // pred_fallthru
      _
    // Predicated region
    $region114: #{switchtab_forward.1} parent=1 // pred_check
      _
    $region115: #{switchtab_forward.1} parent=1 // pred_check_branch
      %218 = sbr.rel (0) target = $region117
    $region116: #{switchtab_forward.1} parent=1 // pred_region
      %219 = dma.done [#allocation8], 16
    $region117: #{switchtab_forward.1} parent=1 // pred_fallthru
      _
    // Predicated region
    $region118: #{switchtab_forward.1} parent=1 // pred_check
      _
    $region119: #{switchtab_forward.1} parent=1 // pred_check_branch
      %221 = sbr.rel (0) target = $region121
    $region120: #{switchtab_forward.1} parent=1 // pred_region
      %222 = dma.done [#allocation11], 16
    $region121: #{switchtab_forward.1} parent=1 // pred_fallthru
      _
    // Predicated region
    $region122: #{switchtab_forward.1} parent=1 // pred_check
      _
    $region123: #{switchtab_forward.1} parent=1 // pred_check_branch
      %224 = sbr.rel (0) target = $region125
    $region124: #{switchtab_forward.1} parent=1 // pred_region
      %225 = dma.done [#allocation11], 512
    $region125: #{switchtab_forward.1} parent=1 // pred_fallthru
      _
    // Predicated region
    $region126: #{switchtab_forward.1} parent=1 // pred_check
      _
    $region127: #{switchtab_forward.1} parent=1 // pred_check_branch
      %227 = sbr.rel (0) target = $region129
    $region128: #{switchtab_forward.1} parent=1 // pred_region
      %228 = dma.done [#allocation14], 16
    $region129: #{switchtab_forward.1} parent=1 // pred_fallthru
      _
    // Predicated region
    $region130: #{switchtab_forward.1} parent=1 // pred_check
      _
    $region131: #{switchtab_forward.1} parent=1 // pred_check_branch
      %230 = sbr.rel (0) target = $region133
    $region132: #{switchtab_forward.1} parent=1 // pred_region
      %231 = dma.done [#allocation14], 16
    $region133: #{switchtab_forward.1} parent=1 // pred_fallthru
      _
    // Predicated region
    $region134: #{switchtab_forward.1} parent=1 // pred_check
      _
    $region135: #{switchtab_forward.1} parent=1 // pred_check_branch
      %233 = sbr.rel (0) target = $region137
    $region136: #{switchtab_forward.1} parent=1 // pred_region
      %234 = dma.done [#allocation17], 16
    $region137: #{switchtab_forward.1} parent=1 // pred_fallthru
      _
    // Predicated region
    $region138: #{switchtab_forward.1} parent=1 // pred_check
      _
    $region139: #{switchtab_forward.1} parent=1 // pred_check_branch
      %236 = sbr.rel (0) target = $region141
    $region140: #{switchtab_forward.1} parent=1 // pred_region
      %237 = dma.done [#allocation17], 16
    $region141: #{switchtab_forward.1} parent=1 // pred_fallthru
      _
    // Predicated region
    $region142: #{switchtab_forward.1} parent=1 // pred_check
      _
    $region143: #{switchtab_forward.1} parent=1 // pred_check_branch
      %239 = sbr.rel (0) target = $region145
    $region144: #{switchtab_forward.1} parent=1 // pred_region
      %240 = dma.done [#allocation20], 512
    $region145: #{switchtab_forward.1} parent=1 // pred_fallthru
      _
    // Predicated region
    $region146: #{switchtab_forward.1} parent=1 // pred_check
      _
    $region147: #{switchtab_forward.1} parent=1 // pred_check_branch
      %242 = sbr.rel (0) target = $region149
    $region148: #{switchtab_forward.1} parent=1 // pred_region
      %243 = dma.done [#allocation20], 512
    $region149: #{switchtab_forward.1} parent=1 // pred_fallthru
      _
    // Predicated region
    $region150: #{switchtab_forward.1} parent=1 // pred_check
      _
    $region151: #{switchtab_forward.1} parent=1 // pred_check_branch
      %245 = sbr.rel (0) target = $region153
    $region152: #{switchtab_forward.1} parent=1 // pred_region
      %246 = dma.done [#allocation23], 512
    $region153: #{switchtab_forward.1} parent=1 // pred_fallthru
      _
    %v247 = vld [vmem:[%s0] sm:$0xff]
    %v248 = vld [vmem:[%s0 + $0x8] sm:$0xff]
    %v249 = vld [vmem:[%s1] sm:$0xff]
    %v250 = vld [vmem:[%s1 + $0x8] sm:$0xff]
    %v251 = vld [vmem:[%s1 + $0x10] sm:$0xff]
    %v252 = vld [vmem:[%s1 + $0x18] sm:$0xff]
    %v253 = vld [vmem:[#allocation2] sm:$0x1]
    %v255 = vlaneseq
    %v256 = vshrl.u32 %v255, 7
    %v257 = vsub.s32 0, %v256
    %v258 = vrot.slane %v253, %v257
    %vm260 = vcmask 261120
    %v262 = vsel %vm260, %v247, 0
    %v265 = vsel %vm260, %v248, 0
    %267 = vmatprep.subr.mxu0 0.0
    %268 = vmatpush1.msra.mxu0 %v249
    %269 = vmatprep.subr.mxu0 0.0
    %270 = vmatpush1.msra.mxu0 %v250
    %271 = vmatprep.subr.mxu0 0.0
    %272 = vmatpush1.msra.mxu0 %v251
    %273 = vmatprep.subr.mxu0 0.0
    %274 = vmatpush1.msra.mxu0 %v252
    %275 = vmatprep.subr.mxu0 0.0
    %276 = vmatpush1.msra.mxu0 0.0
    %277 = vmatprep.subr.mxu0 0.0
    %278 = vmatpush1.msra.mxu0 0.0
    %279 = vmatprep.subr.mxu0 0.0
    %280 = vmatpush1.msra.mxu0 0.0
    %281 = vmatprep.subr.mxu0 0.0
    %282 = vmatpush1.msra.mxu0 0.0
    %283 = vmatprep.subr.mxu0 0.0
    %284 = vmatpush1.msra.mxu0 0.0
    %285 = vmatprep.subr.mxu0 0.0
    %286 = vmatpush1.msra.mxu0 0.0
    %287 = vmatprep.subr.mxu0 0.0
    %288 = vmatpush1.msra.mxu0 0.0
    %289 = vmatprep.subr.mxu0 0.0
    %290 = vmatpush1.msra.mxu0 0.0
    %291 = vmatprep.subr.mxu0 0.0
    %292 = vmatpush1.msra.mxu0 0.0
    %293 = vmatprep.subr.mxu0 0.0
    %294 = vmatpush1.msra.mxu0 0.0
    %295 = vmatprep.subr.mxu0 0.0
    %296 = vmatpush1.msra.mxu0 0.0
    %297 = vmatprep.subr.mxu0 0.0
    %298 = vmatpush1.msra.mxu0 0.0
    %299 = vmatprep.subr.mxu0 0.0
    %300 = vmatpush1.msra.mxu0 0.0
    %301 = vmatprep.subr.mxu0 0.0
    %302 = vmatpush1.msra.mxu0 0.0
    %303 = vmatprep.subr.mxu0 0.0
    %304 = vmatpush1.msra.mxu0 0.0
    %305 = vmatprep.subr.mxu0 0.0
    %306 = vmatpush1.msra.mxu0 0.0
    %307 = vmatprep.subr.mxu0 0.0
    %308 = vmatpush1.msra.mxu0 0.0
    %309 = vmatprep.subr.mxu0 0.0
    %310 = vmatpush1.msra.mxu0 0.0
    %311 = vmatprep.subr.mxu0 0.0
    %312 = vmatpush1.msra.mxu0 0.0
    %313 = vmatprep.subr.mxu0 0.0
    %314 = vmatpush1.msra.mxu0 0.0
    %315 = vmatprep.subr.mxu0 0.0
    %316 = vmatpush1.msra.mxu0 0.0
    %317 = vmatprep.subr.mxu0 0.0
    %318 = vmatpush1.msra.mxu0 0.0
    %319 = vmatprep.subr.mxu0 0.0
    %320 = vmatpush1.msra.mxu0 0.0
    %321 = vmatprep.subr.mxu0 0.0
    %322 = vmatpush1.msra.mxu0 0.0
    %323 = vmatprep.subr.mxu0 0.0
    %324 = vmatpush1.msra.mxu0 0.0
    %325 = vmatprep.subr.mxu0 0.0
    %326 = vmatpush1.msra.mxu0 0.0
    %327 = vmatprep.subr.mxu0 0.0
    %328 = vmatpush1.msra.mxu0 0.0
    %329 = vmatprep.subr.mxu0 0.0
    %330 = vmatpush1.msra.mxu0 0.0
    %331 = vmatprep.mubr.f32.mxu0 0.0
    %332 = vmatmul.mubr.f32.gmra.mrb[0].mxu0 %v262
    %v333 = vpop.f32.mrb[0].mxu0
    %v334 = vadd.f32 %v258, %v333
    %v335 = vpop.f32.mrb[0].mxu0
    %336 = vmatprep.mubr.f32.mxu0 0.0
    %337 = vmatmul.mubr.f32.gmra.mrb[0].mxu0 %v265
    %v338 = vpop.f32.mrb[0].mxu0
    %v339 = vadd.f32 %v258, %v338
    %v340 = vpop.f32.mrb[0].mxu0
    %341 = vdwg.mxu0
    %v342 = vld [vmem:[%s3] sm:$0xff]
    %v343 = vld [vmem:[%s3 + $0x8] sm:$0xff]
    %v344 = vld [vmem:[%s3 + $0x10] sm:$0xff]
    %v345 = vld [vmem:[%s3 + $0x18] sm:$0xff]
    %v346 = vld [vmem:[#allocation4] sm:$0x1]
    %v348 = vlaneseq
    %v349 = vshrl.u32 %v348, 7
    %v350 = vsub.s32 0, %v349
    %v351 = vrot.slane %v346, %v350
    %353 = vmatprep.subr.mxu0 0.0
    %354 = vmatpush1.msra.mxu0 %v342
    %355 = vmatprep.subr.mxu0 0.0
    %356 = vmatpush1.msra.mxu0 %v343
    %357 = vmatprep.subr.mxu0 0.0
    %358 = vmatpush1.msra.mxu0 %v344
    %359 = vmatprep.subr.mxu0 0.0
    %360 = vmatpush1.msra.mxu0 %v345
    %361 = vmatprep.subr.mxu0 0.0
    %362 = vmatpush1.msra.mxu0 0.0
    %363 = vmatprep.subr.mxu0 0.0
    %364 = vmatpush1.msra.mxu0 0.0
    %365 = vmatprep.subr.mxu0 0.0
    %366 = vmatpush1.msra.mxu0 0.0
    %367 = vmatprep.subr.mxu0 0.0
    %368 = vmatpush1.msra.mxu0 0.0
    %369 = vmatprep.subr.mxu0 0.0
    %370 = vmatpush1.msra.mxu0 0.0
    %371 = vmatprep.subr.mxu0 0.0
    %372 = vmatpush1.msra.mxu0 0.0
    %373 = vmatprep.subr.mxu0 0.0
    %374 = vmatpush1.msra.mxu0 0.0
    %375 = vmatprep.subr.mxu0 0.0
    %376 = vmatpush1.msra.mxu0 0.0
    %377 = vmatprep.subr.mxu0 0.0
    %378 = vmatpush1.msra.mxu0 0.0
    %379 = vmatprep.subr.mxu0 0.0
    %380 = vmatpush1.msra.mxu0 0.0
    %381 = vmatprep.subr.mxu0 0.0
    %382 = vmatpush1.msra.mxu0 0.0
    %383 = vmatprep.subr.mxu0 0.0
    %384 = vmatpush1.msra.mxu0 0.0
    %385 = vmatprep.subr.mxu0 0.0
    %386 = vmatpush1.msra.mxu0 0.0
    %387 = vmatprep.subr.mxu0 0.0
    %388 = vmatpush1.msra.mxu0 0.0
    %389 = vmatprep.subr.mxu0 0.0
    %390 = vmatpush1.msra.mxu0 0.0
    %391 = vmatprep.subr.mxu0 0.0
    %392 = vmatpush1.msra.mxu0 0.0
    %393 = vmatprep.subr.mxu0 0.0
    %394 = vmatpush1.msra.mxu0 0.0
    %395 = vmatprep.subr.mxu0 0.0
    %396 = vmatpush1.msra.mxu0 0.0
    %397 = vmatprep.subr.mxu0 0.0
    %398 = vmatpush1.msra.mxu0 0.0
    %399 = vmatprep.subr.mxu0 0.0
    %400 = vmatpush1.msra.mxu0 0.0
    %401 = vmatprep.subr.mxu0 0.0
    %402 = vmatpush1.msra.mxu0 0.0
    %403 = vmatprep.subr.mxu0 0.0
    %404 = vmatpush1.msra.mxu0 0.0
    %405 = vmatprep.subr.mxu0 0.0
    %406 = vmatpush1.msra.mxu0 0.0
    %407 = vmatprep.subr.mxu0 0.0
    %408 = vmatpush1.msra.mxu0 0.0
    %409 = vmatprep.subr.mxu0 0.0
    %410 = vmatpush1.msra.mxu0 0.0
    %411 = vmatprep.subr.mxu0 0.0
    %412 = vmatpush1.msra.mxu0 0.0
    %413 = vmatprep.subr.mxu0 0.0
    %414 = vmatpush1.msra.mxu0 0.0
    %415 = vmatprep.subr.mxu0 0.0
    %416 = vmatpush1.msra.mxu0 0.0
    %417 = vmatprep.mubr.f32.mxu0 0.0
    %418 = vmatmul.mubr.f32.gmra.mrb[0].mxu0 %v262
    %v419 = vpop.f32.mrb[0].mxu0
    %v420 = vadd.f32 %v351, %v419
    %v421 = vpop.f32.mrb[0].mxu0
    %422 = vmatprep.mubr.f32.mxu0 0.0
    %423 = vmatmul.mubr.f32.gmra.mrb[0].mxu0 %v265
    %v424 = vpop.f32.mrb[0].mxu0
    %v425 = vadd.f32 %v351, %v424
    %v426 = vpop.f32.mrb[0].mxu0
    %427 = vdwg.mxu0
    %v428 = vld [vmem:[%s5] sm:$0xff]
    %v429 = vld [vmem:[%s5 + $0x8] sm:$0xff]
    %v430 = vld [vmem:[%s5 + $0x10] sm:$0xff]
    %v431 = vld [vmem:[%s5 + $0x18] sm:$0xff]
    %v432 = vld [vmem:[#allocation6] sm:$0x1]
    %v434 = vlaneseq
    %v435 = vshrl.u32 %v434, 7
    %v436 = vsub.s32 0, %v435
    %v437 = vrot.slane %v432, %v436
    %439 = vmatprep.subr.mxu0 0.0
    %440 = vmatpush1.msra.mxu0 %v428
    %441 = vmatprep.subr.mxu0 0.0
    %442 = vmatpush1.msra.mxu0 %v429
    %443 = vmatprep.subr.mxu0 0.0
    %444 = vmatpush1.msra.mxu0 %v430
    %445 = vmatprep.subr.mxu0 0.0
    %446 = vmatpush1.msra.mxu0 %v431
    %447 = vmatprep.subr.mxu0 0.0
    %448 = vmatpush1.msra.mxu0 0.0
    %449 = vmatprep.subr.mxu0 0.0
    %450 = vmatpush1.msra.mxu0 0.0
    %451 = vmatprep.subr.mxu0 0.0
    %452 = vmatpush1.msra.mxu0 0.0
    %453 = vmatprep.subr.mxu0 0.0
    %454 = vmatpush1.msra.mxu0 0.0
    %455 = vmatprep.subr.mxu0 0.0
    %456 = vmatpush1.msra.mxu0 0.0
    %457 = vmatprep.subr.mxu0 0.0
    %458 = vmatpush1.msra.mxu0 0.0
    %459 = vmatprep.subr.mxu0 0.0
    %460 = vmatpush1.msra.mxu0 0.0
    %461 = vmatprep.subr.mxu0 0.0
    %462 = vmatpush1.msra.mxu0 0.0
    %463 = vmatprep.subr.mxu0 0.0
    %464 = vmatpush1.msra.mxu0 0.0
    %465 = vmatprep.subr.mxu0 0.0
    %466 = vmatpush1.msra.mxu0 0.0
    %467 = vmatprep.subr.mxu0 0.0
    %468 = vmatpush1.msra.mxu0 0.0
    %469 = vmatprep.subr.mxu0 0.0
    %470 = vmatpush1.msra.mxu0 0.0
    %471 = vmatprep.subr.mxu0 0.0
    %472 = vmatpush1.msra.mxu0 0.0
    %473 = vmatprep.subr.mxu0 0.0
    %474 = vmatpush1.msra.mxu0 0.0
    %475 = vmatprep.subr.mxu0 0.0
    %476 = vmatpush1.msra.mxu0 0.0
    %477 = vmatprep.subr.mxu0 0.0
    %478 = vmatpush1.msra.mxu0 0.0
    %479 = vmatprep.subr.mxu0 0.0
    %480 = vmatpush1.msra.mxu0 0.0
    %481 = vmatprep.subr.mxu0 0.0
    %482 = vmatpush1.msra.mxu0 0.0
    %483 = vmatprep.subr.mxu0 0.0
    %484 = vmatpush1.msra.mxu0 0.0
    %485 = vmatprep.subr.mxu0 0.0
    %486 = vmatpush1.msra.mxu0 0.0
    %487 = vmatprep.subr.mxu0 0.0
    %488 = vmatpush1.msra.mxu0 0.0
    %489 = vmatprep.subr.mxu0 0.0
    %490 = vmatpush1.msra.mxu0 0.0
    %491 = vmatprep.subr.mxu0 0.0
    %492 = vmatpush1.msra.mxu0 0.0
    %493 = vmatprep.subr.mxu0 0.0
    %494 = vmatpush1.msra.mxu0 0.0
    %495 = vmatprep.subr.mxu0 0.0
    %496 = vmatpush1.msra.mxu0 0.0
    %497 = vmatprep.subr.mxu0 0.0
    %498 = vmatpush1.msra.mxu0 0.0
    %499 = vmatprep.subr.mxu0 0.0
    %500 = vmatpush1.msra.mxu0 0.0
    %501 = vmatprep.subr.mxu0 0.0
    %502 = vmatpush1.msra.mxu0 0.0
    %503 = vmatprep.mubr.f32.mxu0 0.0
    %504 = vmatmul.mubr.f32.gmra.mrb[0].mxu0 %v262
    %v505 = vpop.f32.mrb[0].mxu0
    %v506 = vadd.f32 %v437, %v505
    %v507 = vpop.f32.mrb[0].mxu0
    %508 = vmatprep.mubr.f32.mxu0 0.0
    %509 = vmatmul.mubr.f32.gmra.mrb[0].mxu0 %v265
    %v510 = vpop.f32.mrb[0].mxu0
    %v511 = vadd.f32 %v437, %v510
    %v512 = vpop.f32.mrb[0].mxu0
    %513 = vdwg.mxu0
    %v514 = vlaneseq
    %v515 = vshrl.u32 %v514, 7
    %v516 = vadd.s32 %v515, 8
    %v517 = vlaneseq
    %v518 = vand.u32 %v517, 127
    %vm519 = vcmp.lt.s32.totalorder %v515, 8
    %vm520 = vcmp.lt.s32.totalorder %v516, 8
    %vm521 = vcmp.lt.s32.totalorder %v518, 8
    %vm522 = vmxor %vm519, %vm521
    %vm523 = vmxor %vm520, %vm521
    %vm524 = vmxor %vm522, 1
    %vm525 = vmxor %vm523, 1
    %v526 = vld [vmem:[%s7] sm:$0xff]
    %v527 = vld [vmem:[%s7 + $0x8] sm:$0xff]
    %v528 = vld [vmem:[%s7 + $0x10] sm:$0xff]
    %v529 = vld [vmem:[%s7 + $0x18] sm:$0xff]
    %vm530 = vcmask 130048
    %v532 = vsel %vm530, %v334, 0
    %v535 = vsel %vm530, %v339, 0
    %v538 = vsel %vm530, %v420, 0
    %v541 = vsel %vm530, %v425, 0
    %543 = vmatprep.subr.mxu0 0.0
    %544 = vmatpush1.xpose.msra.mxu0 %v538
    %545 = vmatprep.subr.mxu0 0.0
    %546 = vmatpush1.xpose.msra.mxu0 %v541
    %547 = vmatprep.subr.mxu0 0.0
    %548 = vmatpush1.xpose.msra.mxu0 0.0
    %549 = vmatprep.subr.mxu0 0.0
    %550 = vmatpush1.xpose.msra.mxu0 0.0
    %551 = vmatprep.subr.mxu0 0.0
    %552 = vmatpush1.xpose.msra.mxu0 0.0
    %553 = vmatprep.subr.mxu0 0.0
    %554 = vmatpush1.xpose.msra.mxu0 0.0
    %555 = vmatprep.subr.mxu0 0.0
    %556 = vmatpush1.xpose.msra.mxu0 0.0
    %557 = vmatprep.subr.mxu0 0.0
    %558 = vmatpush1.xpose.msra.mxu0 0.0
    %559 = vmatprep.subr.mxu0 0.0
    %560 = vmatpush1.xpose.msra.mxu0 0.0
    %561 = vmatprep.subr.mxu0 0.0
    %562 = vmatpush1.xpose.msra.mxu0 0.0
    %563 = vmatprep.subr.mxu0 0.0
    %564 = vmatpush1.xpose.msra.mxu0 0.0
    %565 = vmatprep.subr.mxu0 0.0
    %566 = vmatpush1.xpose.msra.mxu0 0.0
    %567 = vmatprep.subr.mxu0 0.0
    %568 = vmatpush1.xpose.msra.mxu0 0.0
    %569 = vmatprep.subr.mxu0 0.0
    %570 = vmatpush1.xpose.msra.mxu0 0.0
    %571 = vmatprep.subr.mxu0 0.0
    %572 = vmatpush1.xpose.msra.mxu0 0.0
    %573 = vmatprep.subr.mxu0 0.0
    %574 = vmatpush1.xpose.msra.mxu0 0.0
    %575 = vmatprep.subr.mxu0 0.0
    %576 = vmatpush1.xpose.msra.mxu0 0.0
    %577 = vmatprep.subr.mxu0 0.0
    %578 = vmatpush1.xpose.msra.mxu0 0.0
    %579 = vmatprep.subr.mxu0 0.0
    %580 = vmatpush1.xpose.msra.mxu0 0.0
    %581 = vmatprep.subr.mxu0 0.0
    %582 = vmatpush1.xpose.msra.mxu0 0.0
    %583 = vmatprep.subr.mxu0 0.0
    %584 = vmatpush1.xpose.msra.mxu0 0.0
    %585 = vmatprep.subr.mxu0 0.0
    %586 = vmatpush1.xpose.msra.mxu0 0.0
    %587 = vmatprep.subr.mxu0 0.0
    %588 = vmatpush1.xpose.msra.mxu0 0.0
    %589 = vmatprep.subr.mxu0 0.0
    %590 = vmatpush1.xpose.msra.mxu0 0.0
    %591 = vmatprep.subr.mxu0 0.0
    %592 = vmatpush1.xpose.msra.mxu0 0.0
    %593 = vmatprep.subr.mxu0 0.0
    %594 = vmatpush1.xpose.msra.mxu0 0.0
    %595 = vmatprep.subr.mxu0 0.0
    %596 = vmatpush1.xpose.msra.mxu0 0.0
    %597 = vmatprep.subr.mxu0 0.0
    %598 = vmatpush1.xpose.msra.mxu0 0.0
    %599 = vmatprep.subr.mxu0 0.0
    %600 = vmatpush1.xpose.msra.mxu0 0.0
    %601 = vmatprep.subr.mxu0 0.0
    %602 = vmatpush1.xpose.msra.mxu0 0.0
    %603 = vmatprep.subr.mxu0 0.0
    %604 = vmatpush1.xpose.msra.mxu0 0.0
    %605 = vmatprep.subr.mxu0 0.0
    %606 = vmatpush1.xpose.msra.mxu0 0.0
    %607 = vmatprep.mubr.f32.mxu0 0.0
    %608 = vmatmul.mubr.f32.gmra.mrb[0].mxu0 %v532
    %v609 = vpop.f32.mrb[0].mxu0
    %v610 = vadd.f32 0.0, %v609
    %v611 = vpop.f32.mrb[0].mxu0
    %612 = vmatprep.mubr.f32.mxu0 0.0
    %613 = vmatmul.mubr.f32.gmra.mrb[0].mxu0 %v535
    %v614 = vpop.f32.mrb[0].mxu0
    %v615 = vadd.f32 0.0, %v614
    %v616 = vpop.f32.mrb[0].mxu0
    %617 = vdwg.mxu0
    %v618 = vmul.f32 %v610, 0.25
    %v619 = vmul.f32 %v615, 0.25
    %v620 = vsel %vm524, %v618, -1e+30
    %v621 = vsel %vm525, %v619, -1e+30
    %v622 = vsel %vm530, %v620, -inf
    %623 = vmax.xlane.f32.xlu0 %v622
    %v624 = vpop.xlane.xlu0 %623
    %v625 = vsel %vm530, %v621, -inf
    %626 = vmax.xlane.f32.xlu0 %v625
    %v627 = vpop.xlane.xlu0 %626
    %v628 = vsub.f32 %v620, %v624
    %v629 = vsub.f32 %v621, %v627
    %v630 = vmul.f32 %v628, 1.442695
    %v631 = vpow.pop %v630
    %v632 = vmul.f32 %v629, 1.442695
    %v633 = vpow.pop %v632
    %v634 = vsel %vm530, %v631, 0.0
    %635 = vadd.xlane.f32.xlu0 %v634
    %v636 = vpop.xlane.xlu0 %635
    %v637 = vsel %vm530, %v633, 0.0
    %638 = vadd.xlane.f32.xlu0 %v637
    %v639 = vpop.xlane.xlu0 %638
    %v640 = vrcp.pop %v636
    %v641 = vrcp.pop %v639
    %v642 = vmul.f32 %v631, %v640
    %v643 = vmul.f32 %v633, %v641
    %v645 = vsel %vm530, %v642, 0
    %v648 = vsel %vm530, %v643, 0
    %650 = vmatprep.subr.mxu0 0.0
    %651 = vmatpush1.msra.mxu0 %v506
    %652 = vmatprep.subr.mxu0 0.0
    %653 = vmatpush1.msra.mxu0 %v511
    %654 = vmatprep.subr.mxu0 0.0
    %655 = vmatpush1.msra.mxu0 0.0
    %656 = vmatprep.subr.mxu0 0.0
    %657 = vmatpush1.msra.mxu0 0.0
    %658 = vmatprep.subr.mxu0 0.0
    %659 = vmatpush1.msra.mxu0 0.0
    %660 = vmatprep.subr.mxu0 0.0
    %661 = vmatpush1.msra.mxu0 0.0
    %662 = vmatprep.subr.mxu0 0.0
    %663 = vmatpush1.msra.mxu0 0.0
    %664 = vmatprep.subr.mxu0 0.0
    %665 = vmatpush1.msra.mxu0 0.0
    %666 = vmatprep.subr.mxu0 0.0
    %667 = vmatpush1.msra.mxu0 0.0
    %668 = vmatprep.subr.mxu0 0.0
    %669 = vmatpush1.msra.mxu0 0.0
    %670 = vmatprep.subr.mxu0 0.0
    %671 = vmatpush1.msra.mxu0 0.0
    %672 = vmatprep.subr.mxu0 0.0
    %673 = vmatpush1.msra.mxu0 0.0
    %674 = vmatprep.subr.mxu0 0.0
    %675 = vmatpush1.msra.mxu0 0.0
    %676 = vmatprep.subr.mxu0 0.0
    %677 = vmatpush1.msra.mxu0 0.0
    %678 = vmatprep.subr.mxu0 0.0
    %679 = vmatpush1.msra.mxu0 0.0
    %680 = vmatprep.subr.mxu0 0.0
    %681 = vmatpush1.msra.mxu0 0.0
    %682 = vmatprep.subr.mxu0 0.0
    %683 = vmatpush1.msra.mxu0 0.0
    %684 = vmatprep.subr.mxu0 0.0
    %685 = vmatpush1.msra.mxu0 0.0
    %686 = vmatprep.subr.mxu0 0.0
    %687 = vmatpush1.msra.mxu0 0.0
    %688 = vmatprep.subr.mxu0 0.0
    %689 = vmatpush1.msra.mxu0 0.0
    %690 = vmatprep.subr.mxu0 0.0
    %691 = vmatpush1.msra.mxu0 0.0
    %692 = vmatprep.subr.mxu0 0.0
    %693 = vmatpush1.msra.mxu0 0.0
    %694 = vmatprep.subr.mxu0 0.0
    %695 = vmatpush1.msra.mxu0 0.0
    %696 = vmatprep.subr.mxu0 0.0
    %697 = vmatpush1.msra.mxu0 0.0
    %698 = vmatprep.subr.mxu0 0.0
    %699 = vmatpush1.msra.mxu0 0.0
    %700 = vmatprep.subr.mxu0 0.0
    %701 = vmatpush1.msra.mxu0 0.0
    %702 = vmatprep.subr.mxu0 0.0
    %703 = vmatpush1.msra.mxu0 0.0
    %704 = vmatprep.subr.mxu0 0.0
    %705 = vmatpush1.msra.mxu0 0.0
    %706 = vmatprep.subr.mxu0 0.0
    %707 = vmatpush1.msra.mxu0 0.0
    %708 = vmatprep.subr.mxu0 0.0
    %709 = vmatpush1.msra.mxu0 0.0
    %710 = vmatprep.subr.mxu0 0.0
    %711 = vmatpush1.msra.mxu0 0.0
    %712 = vmatprep.subr.mxu0 0.0
    %713 = vmatpush1.msra.mxu0 0.0
    %714 = vmatprep.mubr.f32.mxu0 0.0
    %715 = vmatmul.mubr.f32.gmra.mrb[0].mxu0 %v645
    %v716 = vpop.f32.mrb[0].mxu0
    %v717 = vadd.f32 0.0, %v716
    %v718 = vpop.f32.mrb[0].mxu0
    %719 = vmatprep.mubr.f32.mxu0 0.0
    %720 = vmatmul.mubr.f32.gmra.mrb[0].mxu0 %v648
    %v721 = vpop.f32.mrb[0].mxu0
    %v722 = vadd.f32 0.0, %v721
    %v723 = vpop.f32.mrb[0].mxu0
    %724 = vdwg.mxu0
    %725 = vrot.lane.b32.xlu0 %v334, 112
    %v726 = vpop.permute.xlu0 %725
    %727 = vrot.lane.b32.xlu0 %v339, 112
    %v728 = vpop.permute.xlu0 %727
    %729 = vrot.lane.b32.xlu0 %v420, 112
    %v730 = vpop.permute.xlu0 %729
    %731 = vrot.lane.b32.xlu0 %v425, 112
    %v732 = vpop.permute.xlu0 %731
    %v733 = vsel %vm530, %v726, 0
    %v735 = vsel %vm530, %v728, 0
    %v737 = vsel %vm530, %v730, 0
    %v739 = vsel %vm530, %v732, 0
    %741 = vmatprep.subr.mxu0 0.0
    %742 = vmatpush1.xpose.msra.mxu0 %v737
    %743 = vmatprep.subr.mxu0 0.0
    %744 = vmatpush1.xpose.msra.mxu0 %v739
    %745 = vmatprep.subr.mxu0 0.0
    %746 = vmatpush1.xpose.msra.mxu0 0.0
    %747 = vmatprep.subr.mxu0 0.0
    %748 = vmatpush1.xpose.msra.mxu0 0.0
    %749 = vmatprep.subr.mxu0 0.0
    %750 = vmatpush1.xpose.msra.mxu0 0.0
    %751 = vmatprep.subr.mxu0 0.0
    %752 = vmatpush1.xpose.msra.mxu0 0.0
    %753 = vmatprep.subr.mxu0 0.0
    %754 = vmatpush1.xpose.msra.mxu0 0.0
    %755 = vmatprep.subr.mxu0 0.0
    %756 = vmatpush1.xpose.msra.mxu0 0.0
    %757 = vmatprep.subr.mxu0 0.0
    %758 = vmatpush1.xpose.msra.mxu0 0.0
    %759 = vmatprep.subr.mxu0 0.0
    %760 = vmatpush1.xpose.msra.mxu0 0.0
    %761 = vmatprep.subr.mxu0 0.0
    %762 = vmatpush1.xpose.msra.mxu0 0.0
    %763 = vmatprep.subr.mxu0 0.0
    %764 = vmatpush1.xpose.msra.mxu0 0.0
    %765 = vmatprep.subr.mxu0 0.0
    %766 = vmatpush1.xpose.msra.mxu0 0.0
    %767 = vmatprep.subr.mxu0 0.0
    %768 = vmatpush1.xpose.msra.mxu0 0.0
    %769 = vmatprep.subr.mxu0 0.0
    %770 = vmatpush1.xpose.msra.mxu0 0.0
    %771 = vmatprep.subr.mxu0 0.0
    %772 = vmatpush1.xpose.msra.mxu0 0.0
    %773 = vmatprep.subr.mxu0 0.0
    %774 = vmatpush1.xpose.msra.mxu0 0.0
    %775 = vmatprep.subr.mxu0 0.0
    %776 = vmatpush1.xpose.msra.mxu0 0.0
    %777 = vmatprep.subr.mxu0 0.0
    %778 = vmatpush1.xpose.msra.mxu0 0.0
    %779 = vmatprep.subr.mxu0 0.0
    %780 = vmatpush1.xpose.msra.mxu0 0.0
    %781 = vmatprep.subr.mxu0 0.0
    %782 = vmatpush1.xpose.msra.mxu0 0.0
    %783 = vmatprep.subr.mxu0 0.0
    %784 = vmatpush1.xpose.msra.mxu0 0.0
    %785 = vmatprep.subr.mxu0 0.0
    %786 = vmatpush1.xpose.msra.mxu0 0.0
    %787 = vmatprep.subr.mxu0 0.0
    %788 = vmatpush1.xpose.msra.mxu0 0.0
    %789 = vmatprep.subr.mxu0 0.0
    %790 = vmatpush1.xpose.msra.mxu0 0.0
    %791 = vmatprep.subr.mxu0 0.0
    %792 = vmatpush1.xpose.msra.mxu0 0.0
    %793 = vmatprep.subr.mxu0 0.0
    %794 = vmatpush1.xpose.msra.mxu0 0.0
    %795 = vmatprep.subr.mxu0 0.0
    %796 = vmatpush1.xpose.msra.mxu0 0.0
    %797 = vmatprep.subr.mxu0 0.0
    %798 = vmatpush1.xpose.msra.mxu0 0.0
    %799 = vmatprep.subr.mxu0 0.0
    %800 = vmatpush1.xpose.msra.mxu0 0.0
    %801 = vmatprep.subr.mxu0 0.0
    %802 = vmatpush1.xpose.msra.mxu0 0.0
    %803 = vmatprep.subr.mxu0 0.0
    %804 = vmatpush1.xpose.msra.mxu0 0.0
    %805 = vmatprep.mubr.f32.mxu0 0.0
    %806 = vmatmul.mubr.f32.gmra.mrb[0].mxu0 %v733
    %v807 = vpop.f32.mrb[0].mxu0
    %v808 = vadd.f32 0.0, %v807
    %v809 = vpop.f32.mrb[0].mxu0
    %810 = vmatprep.mubr.f32.mxu0 0.0
    %811 = vmatmul.mubr.f32.gmra.mrb[0].mxu0 %v735
    %v812 = vpop.f32.mrb[0].mxu0
    %v813 = vadd.f32 0.0, %v812
    %v814 = vpop.f32.mrb[0].mxu0
    %815 = vdwg.mxu0
    %v816 = vmul.f32 %v808, 0.25
    %v817 = vmul.f32 %v813, 0.25
    %v818 = vsel %vm524, %v816, -1e+30
    %v819 = vsel %vm525, %v817, -1e+30
    %v820 = vsel %vm530, %v818, -inf
    %821 = vmax.xlane.f32.xlu0 %v820
    %v822 = vpop.xlane.xlu0 %821
    %v823 = vsel %vm530, %v819, -inf
    %824 = vmax.xlane.f32.xlu0 %v823
    %v825 = vpop.xlane.xlu0 %824
    %v826 = vsub.f32 %v818, %v822
    %v827 = vsub.f32 %v819, %v825
    %v828 = vmul.f32 %v826, 1.442695
    %v829 = vpow.pop %v828
    %v830 = vmul.f32 %v827, 1.442695
    %v831 = vpow.pop %v830
    %v832 = vsel %vm530, %v829, 0.0
    %833 = vadd.xlane.f32.xlu0 %v832
    %v834 = vpop.xlane.xlu0 %833
    %v835 = vsel %vm530, %v831, 0.0
    %836 = vadd.xlane.f32.xlu0 %v835
    %v837 = vpop.xlane.xlu0 %836
    %v838 = vrcp.pop %v834
    %v839 = vrcp.pop %v837
    %v840 = vmul.f32 %v829, %v838
    %v841 = vmul.f32 %v831, %v839
    %844 = vrot.lane.b32.xlu0 %v506, 112
    %v845 = vpop.permute.xlu0 %844
    %846 = vrot.lane.b32.xlu0 %v511, 112
    %v847 = vpop.permute.xlu0 %846
    %v851 = vsel %vm530, %v840, 0
    %v854 = vsel %vm530, %v841, 0
    %856 = vmatprep.subr.mxu0 0.0
    %857 = vmatpush1.msra.mxu0 %v845
    %858 = vmatprep.subr.mxu0 0.0
    %859 = vmatpush1.msra.mxu0 %v847
    %860 = vmatprep.subr.mxu0 0.0
    %861 = vmatpush1.msra.mxu0 0.0
    %862 = vmatprep.subr.mxu0 0.0
    %863 = vmatpush1.msra.mxu0 0.0
    %864 = vmatprep.subr.mxu0 0.0
    %865 = vmatpush1.msra.mxu0 0.0
    %866 = vmatprep.subr.mxu0 0.0
    %867 = vmatpush1.msra.mxu0 0.0
    %868 = vmatprep.subr.mxu0 0.0
    %869 = vmatpush1.msra.mxu0 0.0
    %870 = vmatprep.subr.mxu0 0.0
    %871 = vmatpush1.msra.mxu0 0.0
    %872 = vmatprep.subr.mxu0 0.0
    %873 = vmatpush1.msra.mxu0 0.0
    %874 = vmatprep.subr.mxu0 0.0
    %875 = vmatpush1.msra.mxu0 0.0
    %876 = vmatprep.subr.mxu0 0.0
    %877 = vmatpush1.msra.mxu0 0.0
    %878 = vmatprep.subr.mxu0 0.0
    %879 = vmatpush1.msra.mxu0 0.0
    %880 = vmatprep.subr.mxu0 0.0
    %881 = vmatpush1.msra.mxu0 0.0
    %882 = vmatprep.subr.mxu0 0.0
    %883 = vmatpush1.msra.mxu0 0.0
    %884 = vmatprep.subr.mxu0 0.0
    %885 = vmatpush1.msra.mxu0 0.0
    %886 = vmatprep.subr.mxu0 0.0
    %887 = vmatpush1.msra.mxu0 0.0
    %888 = vmatprep.subr.mxu0 0.0
    %889 = vmatpush1.msra.mxu0 0.0
    %890 = vmatprep.subr.mxu0 0.0
    %891 = vmatpush1.msra.mxu0 0.0
    %892 = vmatprep.subr.mxu0 0.0
    %893 = vmatpush1.msra.mxu0 0.0
    %894 = vmatprep.subr.mxu0 0.0
    %895 = vmatpush1.msra.mxu0 0.0
    %896 = vmatprep.subr.mxu0 0.0
    %897 = vmatpush1.msra.mxu0 0.0
    %898 = vmatprep.subr.mxu0 0.0
    %899 = vmatpush1.msra.mxu0 0.0
    %900 = vmatprep.subr.mxu0 0.0
    %901 = vmatpush1.msra.mxu0 0.0
    %902 = vmatprep.subr.mxu0 0.0
    %903 = vmatpush1.msra.mxu0 0.0
    %904 = vmatprep.subr.mxu0 0.0
    %905 = vmatpush1.msra.mxu0 0.0
    %906 = vmatprep.subr.mxu0 0.0
    %907 = vmatpush1.msra.mxu0 0.0
    %908 = vmatprep.subr.mxu0 0.0
    %909 = vmatpush1.msra.mxu0 0.0
    %910 = vmatprep.subr.mxu0 0.0
    %911 = vmatpush1.msra.mxu0 0.0
    %912 = vmatprep.subr.mxu0 0.0
    %913 = vmatpush1.msra.mxu0 0.0
    %914 = vmatprep.subr.mxu0 0.0
    %915 = vmatpush1.msra.mxu0 0.0
    %916 = vmatprep.subr.mxu0 0.0
    %917 = vmatpush1.msra.mxu0 0.0
    %918 = vmatprep.subr.mxu0 0.0
    %919 = vmatpush1.msra.mxu0 0.0
    %920 = vmatprep.mubr.f32.mxu0 0.0
    %921 = vmatmul.mubr.f32.gmra.mrb[0].mxu0 %v851
    %v922 = vpop.f32.mrb[0].mxu0
    %v923 = vadd.f32 0.0, %v922
    %v924 = vpop.f32.mrb[0].mxu0
    %925 = vmatprep.mubr.f32.mxu0 0.0
    %926 = vmatmul.mubr.f32.gmra.mrb[0].mxu0 %v854
    %v927 = vpop.f32.mrb[0].mxu0
    %v928 = vadd.f32 0.0, %v927
    %v929 = vpop.f32.mrb[0].mxu0
    %930 = vdwg.mxu0
    %v932 = vsel %vm530, %v923, 0
    %v935 = vsel %vm530, %v928, 0
    %937 = vmatprep.subr.mxu0 0.0
    %938 = vmatpush1.msra.mxu0 %v528
    %939 = vmatprep.subr.mxu0 0.0
    %940 = vmatpush1.msra.mxu0 %v529
    %941 = vmatprep.subr.mxu0 0.0
    %942 = vmatpush1.msra.mxu0 0.0
    %943 = vmatprep.subr.mxu0 0.0
    %944 = vmatpush1.msra.mxu0 0.0
    %945 = vmatprep.subr.mxu0 0.0
    %946 = vmatpush1.msra.mxu0 0.0
    %947 = vmatprep.subr.mxu0 0.0
    %948 = vmatpush1.msra.mxu0 0.0
    %949 = vmatprep.subr.mxu0 0.0
    %950 = vmatpush1.msra.mxu0 0.0
    %951 = vmatprep.subr.mxu0 0.0
    %952 = vmatpush1.msra.mxu0 0.0
    %953 = vmatprep.subr.mxu0 0.0
    %954 = vmatpush1.msra.mxu0 0.0
    %955 = vmatprep.subr.mxu0 0.0
    %956 = vmatpush1.msra.mxu0 0.0
    %957 = vmatprep.subr.mxu0 0.0
    %958 = vmatpush1.msra.mxu0 0.0
    %959 = vmatprep.subr.mxu0 0.0
    %960 = vmatpush1.msra.mxu0 0.0
    %961 = vmatprep.subr.mxu0 0.0
    %962 = vmatpush1.msra.mxu0 0.0
    %963 = vmatprep.subr.mxu0 0.0
    %964 = vmatpush1.msra.mxu0 0.0
    %965 = vmatprep.subr.mxu0 0.0
    %966 = vmatpush1.msra.mxu0 0.0
    %967 = vmatprep.subr.mxu0 0.0
    %968 = vmatpush1.msra.mxu0 0.0
    %969 = vmatprep.subr.mxu0 0.0
    %970 = vmatpush1.msra.mxu0 0.0
    %971 = vmatprep.subr.mxu0 0.0
    %972 = vmatpush1.msra.mxu0 0.0
    %973 = vmatprep.subr.mxu0 0.0
    %974 = vmatpush1.msra.mxu0 0.0
    %975 = vmatprep.subr.mxu0 0.0
    %976 = vmatpush1.msra.mxu0 0.0
    %977 = vmatprep.subr.mxu0 0.0
    %978 = vmatpush1.msra.mxu0 0.0
    %979 = vmatprep.subr.mxu0 0.0
    %980 = vmatpush1.msra.mxu0 0.0
    %981 = vmatprep.subr.mxu0 0.0
    %982 = vmatpush1.msra.mxu0 0.0
    %983 = vmatprep.subr.mxu0 0.0
    %984 = vmatpush1.msra.mxu0 0.0
    %985 = vmatprep.subr.mxu0 0.0
    %986 = vmatpush1.msra.mxu0 0.0
    %987 = vmatprep.subr.mxu0 0.0
    %988 = vmatpush1.msra.mxu0 0.0
    %989 = vmatprep.subr.mxu0 0.0
    %990 = vmatpush1.msra.mxu0 0.0
    %991 = vmatprep.subr.mxu0 0.0
    %992 = vmatpush1.msra.mxu0 0.0
    %993 = vmatprep.subr.mxu0 0.0
    %994 = vmatpush1.msra.mxu0 0.0
    %995 = vmatprep.subr.mxu0 0.0
    %996 = vmatpush1.msra.mxu0 0.0
    %997 = vmatprep.subr.mxu0 0.0
    %998 = vmatpush1.msra.mxu0 0.0
    %999 = vmatprep.subr.mxu0 0.0
    %1000 = vmatpush1.msra.mxu0 0.0
    %1001 = vmatprep.mubr.f32.mxu0 0.0
    %1002 = vmatmul.mubr.f32.gmra.mrb[0].mxu0 %v932
    %v1003 = vpop.f32.mrb[0].mxu0
    %v1004 = vadd.f32 0.0, %v1003
    %v1005 = vpop.f32.mrb[0].mxu0
    %1006 = vmatprep.mubr.f32.mxu0 0.0
    %1007 = vmatmul.mubr.f32.gmra.mrb[0].mxu0 %v935
    %v1008 = vpop.f32.mrb[0].mxu0
    %v1009 = vadd.f32 0.0, %v1008
    %v1010 = vpop.f32.mrb[0].mxu0
    %1011 = vdwg.mxu0
    %v1013 = vsel %vm530, %v717, 0
    %v1016 = vsel %vm530, %v722, 0
    %1018 = vmatprep.subr.mxu0 0.0
    %1019 = vmatpush1.msra.mxu0 %v526
    %1020 = vmatprep.subr.mxu0 0.0
    %1021 = vmatpush1.msra.mxu0 %v527
    %1022 = vmatprep.subr.mxu0 0.0
    %1023 = vmatpush1.msra.mxu0 0.0
    %1024 = vmatprep.subr.mxu0 0.0
    %1025 = vmatpush1.msra.mxu0 0.0
    %1026 = vmatprep.subr.mxu0 0.0
    %1027 = vmatpush1.msra.mxu0 0.0
    %1028 = vmatprep.subr.mxu0 0.0
    %1029 = vmatpush1.msra.mxu0 0.0
    %1030 = vmatprep.subr.mxu0 0.0
    %1031 = vmatpush1.msra.mxu0 0.0
    %1032 = vmatprep.subr.mxu0 0.0
    %1033 = vmatpush1.msra.mxu0 0.0
    %1034 = vmatprep.subr.mxu0 0.0
    %1035 = vmatpush1.msra.mxu0 0.0
    %1036 = vmatprep.subr.mxu0 0.0
    %1037 = vmatpush1.msra.mxu0 0.0
    %1038 = vmatprep.subr.mxu0 0.0
    %1039 = vmatpush1.msra.mxu0 0.0
    %1040 = vmatprep.subr.mxu0 0.0
    %1041 = vmatpush1.msra.mxu0 0.0
    %1042 = vmatprep.subr.mxu0 0.0
    %1043 = vmatpush1.msra.mxu0 0.0
    %1044 = vmatprep.subr.mxu0 0.0
    %1045 = vmatpush1.msra.mxu0 0.0
    %1046 = vmatprep.subr.mxu0 0.0
    %1047 = vmatpush1.msra.mxu0 0.0
    %1048 = vmatprep.subr.mxu0 0.0
    %1049 = vmatpush1.msra.mxu0 0.0
    %1050 = vmatprep.subr.mxu0 0.0
    %1051 = vmatpush1.msra.mxu0 0.0
    %1052 = vmatprep.subr.mxu0 0.0
    %1053 = vmatpush1.msra.mxu0 0.0
    %1054 = vmatprep.subr.mxu0 0.0
    %1055 = vmatpush1.msra.mxu0 0.0
    %1056 = vmatprep.subr.mxu0 0.0
    %1057 = vmatpush1.msra.mxu0 0.0
    %1058 = vmatprep.subr.mxu0 0.0
    %1059 = vmatpush1.msra.mxu0 0.0
    %1060 = vmatprep.subr.mxu0 0.0
    %1061 = vmatpush1.msra.mxu0 0.0
    %1062 = vmatprep.subr.mxu0 0.0
    %1063 = vmatpush1.msra.mxu0 0.0
    %1064 = vmatprep.subr.mxu0 0.0
    %1065 = vmatpush1.msra.mxu0 0.0
    %1066 = vmatprep.subr.mxu0 0.0
    %1067 = vmatpush1.msra.mxu0 0.0
    %1068 = vmatprep.subr.mxu0 0.0
    %1069 = vmatpush1.msra.mxu0 0.0
    %1070 = vmatprep.subr.mxu0 0.0
    %1071 = vmatpush1.msra.mxu0 0.0
    %1072 = vmatprep.subr.mxu0 0.0
    %1073 = vmatpush1.msra.mxu0 0.0
    %1074 = vmatprep.subr.mxu0 0.0
    %1075 = vmatpush1.msra.mxu0 0.0
    %1076 = vmatprep.subr.mxu0 0.0
    %1077 = vmatpush1.msra.mxu0 0.0
    %1078 = vmatprep.subr.mxu0 0.0
    %1079 = vmatpush1.msra.mxu0 0.0
    %1080 = vmatprep.subr.mxu0 0.0
    %1081 = vmatpush1.msra.mxu0 0.0
    %1082 = vmatprep.mubr.f32.mxu0 0.0
    %1083 = vmatmul.mubr.f32.gmra.mrb[0].mxu0 %v1013
    %v1084 = vpop.f32.mrb[0].mxu0
    %v1085 = vadd.f32 %v1004, %v1084
    %v1086 = vpop.f32.mrb[0].mxu0
    %1087 = vmatprep.mubr.f32.mxu0 0.0
    %1088 = vmatmul.mubr.f32.gmra.mrb[0].mxu0 %v1016
    %v1089 = vpop.f32.mrb[0].mxu0
    %v1090 = vadd.f32 %v1009, %v1089
    %v1091 = vpop.f32.mrb[0].mxu0
    %1092 = vdwg.mxu0
    %v1093 = vld [vmem:[#allocation7] sm:$0x1]
    %v1095 = vlaneseq
    %v1096 = vshrl.u32 %v1095, 7
    %v1097 = vsub.s32 0, %v1096
    %v1098 = vrot.slane %v1093, %v1097
    %v1100 = vadd.f32 %v1085, %v1098
    %v1101 = vadd.f32 %v1090, %v1098
    %v1102 = vadd.f32 %v247, %v1100
    %v1103 = vadd.f32 %v248, %v1101
    %v1104 = vld [vmem:[#allocation9] sm:$0x1]
    %v1105 = vld [vmem:[#allocation10] sm:$0x1]
    %v1106 = vsel %vm260, %v1102, 0.0
    %1107 = vadd.xlane.f32.xlu0 %v1106
    %v1108 = vpop.xlane.xlu0 %1107
    %v1109 = vsel %vm260, %v1103, 0.0
    %1110 = vadd.xlane.f32.xlu0 %v1109
    %v1111 = vpop.xlane.xlu0 %1110
    %v1112 = vrcp.pop 32.0
    %v1113 = vmul.f32 %v1108, %v1112
    %v1114 = vmul.f32 %v1111, %v1112
    %v1115 = vsub.f32 %v1102, %v1113
    %v1116 = vsub.f32 %v1103, %v1114
    %v1117 = vmul.f32 %v1115, %v1115
    %v1118 = vmul.f32 %v1116, %v1116
    %v1119 = vsel %vm260, %v1117, 0.0
    %1120 = vadd.xlane.f32.xlu0 %v1119
    %v1121 = vpop.xlane.xlu0 %1120
    %v1122 = vsel %vm260, %v1118, 0.0
    %1123 = vadd.xlane.f32.xlu0 %v1122
    %v1124 = vpop.xlane.xlu0 %1123
    %v1125 = vmul.f32 %v1121, %v1112
    %v1126 = vmul.f32 %v1124, %v1112
    %v1127 = vadd.f32 %v1125, 1e-05
    %v1128 = vadd.f32 %v1126, 1e-05
    %v1129 = vrsqrt.pop %v1127
    %v1130 = vrsqrt.pop %v1128
    %v1131 = vmul.f32 %v1115, %v1129
    %v1132 = vmul.f32 %v1116, %v1130
    %v1134 = vlaneseq
    %v1135 = vshrl.u32 %v1134, 7
    %v1136 = vsub.s32 0, %v1135
    %v1137 = vrot.slane %v1104, %v1136
    %v1139 = vmul.f32 %v1131, %v1137
    %v1140 = vmul.f32 %v1132, %v1137
    %v1142 = vlaneseq
    %v1143 = vshrl.u32 %v1142, 7
    %v1144 = vsub.s32 0, %v1143
    %v1145 = vrot.slane %v1105, %v1144
    %v1147 = vadd.f32 %v1139, %v1145
    %v1148 = vadd.f32 %v1140, %v1145
    %v1149 = vld [vmem:[#allocation12] sm:$0xff]
    %v1150 = vld [vmem:[#allocation12 + $0x8] sm:$0xff]
    %v1151 = vld [vmem:[#allocation12 + $0x10] sm:$0xff]
    %v1152 = vld [vmem:[#allocation12 + $0x18] sm:$0xff]
    %v1153 = vld [vmem:[#allocation13] sm:$0x1]
    %v1155 = vlaneseq
    %v1156 = vshrl.u32 %v1155, 7
    %v1157 = vsub.s32 0, %v1156
    %v1158 = vrot.slane %v1153, %v1157
    %v1161 = vsel %vm260, %v1147, 0
    %v1164 = vsel %vm260, %v1148, 0
    %1166 = vmatprep.subr.mxu0 0.0
    %1167 = vmatpush1.msra.mxu0 %v1149
    %1168 = vmatprep.subr.mxu0 0.0
    %1169 = vmatpush1.msra.mxu0 %v1150
    %1170 = vmatprep.subr.mxu0 0.0
    %1171 = vmatpush1.msra.mxu0 %v1151
    %1172 = vmatprep.subr.mxu0 0.0
    %1173 = vmatpush1.msra.mxu0 %v1152
    %1174 = vmatprep.subr.mxu0 0.0
    %1175 = vmatpush1.msra.mxu0 0.0
    %1176 = vmatprep.subr.mxu0 0.0
    %1177 = vmatpush1.msra.mxu0 0.0
    %1178 = vmatprep.subr.mxu0 0.0
    %1179 = vmatpush1.msra.mxu0 0.0
    %1180 = vmatprep.subr.mxu0 0.0
    %1181 = vmatpush1.msra.mxu0 0.0
    %1182 = vmatprep.subr.mxu0 0.0
    %1183 = vmatpush1.msra.mxu0 0.0
    %1184 = vmatprep.subr.mxu0 0.0
    %1185 = vmatpush1.msra.mxu0 0.0
    %1186 = vmatprep.subr.mxu0 0.0
    %1187 = vmatpush1.msra.mxu0 0.0
    %1188 = vmatprep.subr.mxu0 0.0
    %1189 = vmatpush1.msra.mxu0 0.0
    %1190 = vmatprep.subr.mxu0 0.0
    %1191 = vmatpush1.msra.mxu0 0.0
    %1192 = vmatprep.subr.mxu0 0.0
    %1193 = vmatpush1.msra.mxu0 0.0
    %1194 = vmatprep.subr.mxu0 0.0
    %1195 = vmatpush1.msra.mxu0 0.0
    %1196 = vmatprep.subr.mxu0 0.0
    %1197 = vmatpush1.msra.mxu0 0.0
    %1198 = vmatprep.subr.mxu0 0.0
    %1199 = vmatpush1.msra.mxu0 0.0
    %1200 = vmatprep.subr.mxu0 0.0
    %1201 = vmatpush1.msra.mxu0 0.0
    %1202 = vmatprep.subr.mxu0 0.0
    %1203 = vmatpush1.msra.mxu0 0.0
    %1204 = vmatprep.subr.mxu0 0.0
    %1205 = vmatpush1.msra.mxu0 0.0
    %1206 = vmatprep.subr.mxu0 0.0
    %1207 = vmatpush1.msra.mxu0 0.0
    %1208 = vmatprep.subr.mxu0 0.0
    %1209 = vmatpush1.msra.mxu0 0.0
    %1210 = vmatprep.subr.mxu0 0.0
    %1211 = vmatpush1.msra.mxu0 0.0
    %1212 = vmatprep.subr.mxu0 0.0
    %1213 = vmatpush1.msra.mxu0 0.0
    %1214 = vmatprep.subr.mxu0 0.0
    %1215 = vmatpush1.msra.mxu0 0.0
    %1216 = vmatprep.subr.mxu0 0.0
    %1217 = vmatpush1.msra.mxu0 0.0
    %1218 = vmatprep.subr.mxu0 0.0
    %1219 = vmatpush1.msra.mxu0 0.0
    %1220 = vmatprep.subr.mxu0 0.0
    %1221 = vmatpush1.msra.mxu0 0.0
    %1222 = vmatprep.subr.mxu0 0.0
    %1223 = vmatpush1.msra.mxu0 0.0
    %1224 = vmatprep.subr.mxu0 0.0
    %1225 = vmatpush1.msra.mxu0 0.0
    %1226 = vmatprep.subr.mxu0 0.0
    %1227 = vmatpush1.msra.mxu0 0.0
    %1228 = vmatprep.subr.mxu0 0.0
    %1229 = vmatpush1.msra.mxu0 0.0
    %1230 = vmatprep.mubr.f32.mxu0 0.0
    %1231 = vmatmul.mubr.f32.gmra.mrb[0].mxu0 %v1161
    %v1232 = vpop.f32.mrb[0].mxu0
    %v1233 = vadd.f32 %v1158, %v1232
    %v1234 = vpop.f32.mrb[0].mxu0
    %1235 = vmatprep.mubr.f32.mxu0 0.0
    %1236 = vmatmul.mubr.f32.gmra.mrb[0].mxu0 %v1164
    %v1237 = vpop.f32.mrb[0].mxu0
    %v1238 = vadd.f32 %v1158, %v1237
    %v1239 = vpop.f32.mrb[0].mxu0
    %1240 = vdwg.mxu0
    %v1241 = vmax.f32 %v1233, 0.0
    %v1242 = vmax.f32 %v1238, 0.0
    %v1243 = vld [vmem:[%s13] sm:$0xff]
    %v1244 = vld [vmem:[%s13 + $0x8] sm:$0xff]
    %v1245 = vld [vmem:[%s13 + $0x10] sm:$0xff]
    %v1246 = vld [vmem:[%s13 + $0x18] sm:$0xff]
    %v1247 = vld [vmem:[%s13 + $0x20] sm:$0xff]
    %v1248 = vld [vmem:[%s13 + $0x28] sm:$0xff]
    %v1249 = vld [vmem:[%s13 + $0x30] sm:$0xff]
    %v1250 = vld [vmem:[%s13 + $0x38] sm:$0xff]
    %v1251 = vld [vmem:[#allocation15] sm:$0x1]
    %v1253 = vlaneseq
    %v1254 = vshrl.u32 %v1253, 7
    %v1255 = vsub.s32 0, %v1254
    %v1256 = vrot.slane %v1251, %v1255
    %vm1258 = vcmask 523264
    %v1260 = vsel %vm1258, %v1241, 0
    %v1263 = vsel %vm1258, %v1242, 0
    %1265 = vmatprep.subr.mxu0 0.0
    %1266 = vmatpush1.msra.mxu0 %v1243
    %1267 = vmatprep.subr.mxu0 0.0
    %1268 = vmatpush1.msra.mxu0 %v1244
    %1269 = vmatprep.subr.mxu0 0.0
    %1270 = vmatpush1.msra.mxu0 %v1245
    %1271 = vmatprep.subr.mxu0 0.0
    %1272 = vmatpush1.msra.mxu0 %v1246
    %1273 = vmatprep.subr.mxu0 0.0
    %1274 = vmatpush1.msra.mxu0 %v1247
    %1275 = vmatprep.subr.mxu0 0.0
    %1276 = vmatpush1.msra.mxu0 %v1248
    %1277 = vmatprep.subr.mxu0 0.0
    %1278 = vmatpush1.msra.mxu0 %v1249
    %1279 = vmatprep.subr.mxu0 0.0
    %1280 = vmatpush1.msra.mxu0 %v1250
    %1281 = vmatprep.subr.mxu0 0.0
    %1282 = vmatpush1.msra.mxu0 0.0
    %1283 = vmatprep.subr.mxu0 0.0
    %1284 = vmatpush1.msra.mxu0 0.0
    %1285 = vmatprep.subr.mxu0 0.0
    %1286 = vmatpush1.msra.mxu0 0.0
    %1287 = vmatprep.subr.mxu0 0.0
    %1288 = vmatpush1.msra.mxu0 0.0
    %1289 = vmatprep.subr.mxu0 0.0
    %1290 = vmatpush1.msra.mxu0 0.0
    %1291 = vmatprep.subr.mxu0 0.0
    %1292 = vmatpush1.msra.mxu0 0.0
    %1293 = vmatprep.subr.mxu0 0.0
    %1294 = vmatpush1.msra.mxu0 0.0
    %1295 = vmatprep.subr.mxu0 0.0
    %1296 = vmatpush1.msra.mxu0 0.0
    %1297 = vmatprep.subr.mxu0 0.0
    %1298 = vmatpush1.msra.mxu0 0.0
    %1299 = vmatprep.subr.mxu0 0.0
    %1300 = vmatpush1.msra.mxu0 0.0
    %1301 = vmatprep.subr.mxu0 0.0
    %1302 = vmatpush1.msra.mxu0 0.0
    %1303 = vmatprep.subr.mxu0 0.0
    %1304 = vmatpush1.msra.mxu0 0.0
    %1305 = vmatprep.subr.mxu0 0.0
    %1306 = vmatpush1.msra.mxu0 0.0
    %1307 = vmatprep.subr.mxu0 0.0
    %1308 = vmatpush1.msra.mxu0 0.0
    %1309 = vmatprep.subr.mxu0 0.0
    %1310 = vmatpush1.msra.mxu0 0.0
    %1311 = vmatprep.subr.mxu0 0.0
    %1312 = vmatpush1.msra.mxu0 0.0
    %1313 = vmatprep.subr.mxu0 0.0
    %1314 = vmatpush1.msra.mxu0 0.0
    %1315 = vmatprep.subr.mxu0 0.0
    %1316 = vmatpush1.msra.mxu0 0.0
    %1317 = vmatprep.subr.mxu0 0.0
    %1318 = vmatpush1.msra.mxu0 0.0
    %1319 = vmatprep.subr.mxu0 0.0
    %1320 = vmatpush1.msra.mxu0 0.0
    %1321 = vmatprep.subr.mxu0 0.0
    %1322 = vmatpush1.msra.mxu0 0.0
    %1323 = vmatprep.subr.mxu0 0.0
    %1324 = vmatpush1.msra.mxu0 0.0
    %1325 = vmatprep.subr.mxu0 0.0
    %1326 = vmatpush1.msra.mxu0 0.0
    %1327 = vmatprep.subr.mxu0 0.0
    %1328 = vmatpush1.msra.mxu0 0.0
    %1329 = vmatprep.mubr.f32.mxu0 0.0
    %1330 = vmatmul.mubr.f32.gmra.mrb[0].mxu0 %v1260
    %v1331 = vpop.f32.mrb[0].mxu0
    %v1332 = vadd.f32 %v1256, %v1331
    %v1333 = vpop.f32.mrb[0].mxu0
    %1334 = vmatprep.mubr.f32.mxu0 0.0
    %1335 = vmatmul.mubr.f32.gmra.mrb[0].mxu0 %v1263
    %v1336 = vpop.f32.mrb[0].mxu0
    %v1337 = vadd.f32 %v1256, %v1336
    %v1338 = vpop.f32.mrb[0].mxu0
    %1339 = vdwg.mxu0
    %v1340 = vadd.f32 %v1147, %v1332
    %v1341 = vadd.f32 %v1148, %v1337
    %v1342 = vld [vmem:[#allocation16] sm:$0x1]
    %v1343 = vld [vmem:[#allocation18] sm:$0x1]
    %v1344 = vsel %vm260, %v1340, 0.0
    %1345 = vadd.xlane.f32.xlu0 %v1344
    %v1346 = vpop.xlane.xlu0 %1345
    %v1347 = vsel %vm260, %v1341, 0.0
    %1348 = vadd.xlane.f32.xlu0 %v1347
    %v1349 = vpop.xlane.xlu0 %1348
    %v1350 = vmul.f32 %v1346, %v1112
    %v1351 = vmul.f32 %v1349, %v1112
    %v1352 = vsub.f32 %v1340, %v1350
    %v1353 = vsub.f32 %v1341, %v1351
    %v1354 = vmul.f32 %v1352, %v1352
    %v1355 = vmul.f32 %v1353, %v1353
    %v1356 = vsel %vm260, %v1354, 0.0
    %1357 = vadd.xlane.f32.xlu0 %v1356
    %v1358 = vpop.xlane.xlu0 %1357
    %v1359 = vsel %vm260, %v1355, 0.0
    %1360 = vadd.xlane.f32.xlu0 %v1359
    %v1361 = vpop.xlane.xlu0 %1360
    %v1362 = vmul.f32 %v1358, %v1112
    %v1363 = vmul.f32 %v1361, %v1112
    %v1364 = vadd.f32 %v1362, 1e-05
    %v1365 = vadd.f32 %v1363, 1e-05
    %v1366 = vrsqrt.pop %v1364
    %v1367 = vrsqrt.pop %v1365
    %v1368 = vmul.f32 %v1352, %v1366
    %v1369 = vmul.f32 %v1353, %v1367
    %v1371 = vlaneseq
    %v1372 = vshrl.u32 %v1371, 7
    %v1373 = vsub.s32 0, %v1372
    %v1374 = vrot.slane %v1342, %v1373
    %v1376 = vmul.f32 %v1368, %v1374
    %v1377 = vmul.f32 %v1369, %v1374
    %v1379 = vlaneseq
    %v1380 = vshrl.u32 %v1379, 7
    %v1381 = vsub.s32 0, %v1380
    %v1382 = vrot.slane %v1343, %v1381
    %v1384 = vadd.f32 %v1376, %v1382
    %v1385 = vadd.f32 %v1377, %v1382
    %v1386 = vld [vmem:[%s17] sm:$0xff]
    %v1387 = vld [vmem:[%s17 + $0x8] sm:$0xff]
    %v1388 = vld [vmem:[%s17 + $0x10] sm:$0xff]
    %v1389 = vld [vmem:[%s17 + $0x18] sm:$0xff]
    %v1390 = vld [vmem:[%s18] sm:$0x1]
    %v1392 = vlaneseq
    %v1393 = vshrl.u32 %v1392, 7
    %v1394 = vsub.s32 0, %v1393
    %v1395 = vrot.slane %v1390, %v1394
    %v1398 = vsel %vm260, %v1384, 0
    %v1401 = vsel %vm260, %v1385, 0
    %1403 = vmatprep.subr.mxu0 0.0
    %1404 = vmatpush1.msra.mxu0 %v1386
    %1405 = vmatprep.subr.mxu0 0.0
    %1406 = vmatpush1.msra.mxu0 %v1387
    %1407 = vmatprep.subr.mxu0 0.0
    %1408 = vmatpush1.msra.mxu0 %v1388
    %1409 = vmatprep.subr.mxu0 0.0
    %1410 = vmatpush1.msra.mxu0 %v1389
    %1411 = vmatprep.subr.mxu0 0.0
    %1412 = vmatpush1.msra.mxu0 0.0
    %1413 = vmatprep.subr.mxu0 0.0
    %1414 = vmatpush1.msra.mxu0 0.0
    %1415 = vmatprep.subr.mxu0 0.0
    %1416 = vmatpush1.msra.mxu0 0.0
    %1417 = vmatprep.subr.mxu0 0.0
    %1418 = vmatpush1.msra.mxu0 0.0
    %1419 = vmatprep.subr.mxu0 0.0
    %1420 = vmatpush1.msra.mxu0 0.0
    %1421 = vmatprep.subr.mxu0 0.0
    %1422 = vmatpush1.msra.mxu0 0.0
    %1423 = vmatprep.subr.mxu0 0.0
    %1424 = vmatpush1.msra.mxu0 0.0
    %1425 = vmatprep.subr.mxu0 0.0
    %1426 = vmatpush1.msra.mxu0 0.0
    %1427 = vmatprep.subr.mxu0 0.0
    %1428 = vmatpush1.msra.mxu0 0.0
    %1429 = vmatprep.subr.mxu0 0.0
    %1430 = vmatpush1.msra.mxu0 0.0
    %1431 = vmatprep.subr.mxu0 0.0
    %1432 = vmatpush1.msra.mxu0 0.0
    %1433 = vmatprep.subr.mxu0 0.0
    %1434 = vmatpush1.msra.mxu0 0.0
    %1435 = vmatprep.subr.mxu0 0.0
    %1436 = vmatpush1.msra.mxu0 0.0
    %1437 = vmatprep.subr.mxu0 0.0
    %1438 = vmatpush1.msra.mxu0 0.0
    %1439 = vmatprep.subr.mxu0 0.0
    %1440 = vmatpush1.msra.mxu0 0.0
    %1441 = vmatprep.subr.mxu0 0.0
    %1442 = vmatpush1.msra.mxu0 0.0
    %1443 = vmatprep.subr.mxu0 0.0
    %1444 = vmatpush1.msra.mxu0 0.0
    %1445 = vmatprep.subr.mxu0 0.0
    %1446 = vmatpush1.msra.mxu0 0.0
    %1447 = vmatprep.subr.mxu0 0.0
    %1448 = vmatpush1.msra.mxu0 0.0
    %1449 = vmatprep.subr.mxu0 0.0
    %1450 = vmatpush1.msra.mxu0 0.0
    %1451 = vmatprep.subr.mxu0 0.0
    %1452 = vmatpush1.msra.mxu0 0.0
    %1453 = vmatprep.subr.mxu0 0.0
    %1454 = vmatpush1.msra.mxu0 0.0
    %1455 = vmatprep.subr.mxu0 0.0
    %1456 = vmatpush1.msra.mxu0 0.0
    %1457 = vmatprep.subr.mxu0 0.0
    %1458 = vmatpush1.msra.mxu0 0.0
    %1459 = vmatprep.subr.mxu0 0.0
    %1460 = vmatpush1.msra.mxu0 0.0
    %1461 = vmatprep.subr.mxu0 0.0
    %1462 = vmatpush1.msra.mxu0 0.0
    %1463 = vmatprep.subr.mxu0 0.0
    %1464 = vmatpush1.msra.mxu0 0.0
    %1465 = vmatprep.subr.mxu0 0.0
    %1466 = vmatpush1.msra.mxu0 0.0
    %1467 = vmatprep.mubr.f32.mxu0 0.0
    %1468 = vmatmul.mubr.f32.gmra.mrb[0].mxu0 %v1398
    %v1469 = vpop.f32.mrb[0].mxu0
    %v1470 = vadd.f32 %v1395, %v1469
    %v1471 = vpop.f32.mrb[0].mxu0
    %1472 = vmatprep.mubr.f32.mxu0 0.0
    %1473 = vmatmul.mubr.f32.gmra.mrb[0].mxu0 %v1401
    %v1474 = vpop.f32.mrb[0].mxu0
    %v1475 = vadd.f32 %v1395, %v1474
    %v1476 = vpop.f32.mrb[0].mxu0
    %1477 = vdwg.mxu0
    %v1478 = vld [vmem:[#allocation19] sm:$0xff]
    %v1479 = vld [vmem:[#allocation19 + $0x8] sm:$0xff]
    %v1480 = vld [vmem:[#allocation19 + $0x10] sm:$0xff]
    %v1481 = vld [vmem:[#allocation19 + $0x18] sm:$0xff]
    %v1482 = vld [vmem:[%s20] sm:$0x1]
    %v1484 = vlaneseq
    %v1485 = vshrl.u32 %v1484, 7
    %v1486 = vsub.s32 0, %v1485
    %v1487 = vrot.slane %v1482, %v1486
    %1489 = vmatprep.subr.mxu0 0.0
    %1490 = vmatpush1.msra.mxu0 %v1478
    %1491 = vmatprep.subr.mxu0 0.0
    %1492 = vmatpush1.msra.mxu0 %v1479
    %1493 = vmatprep.subr.mxu0 0.0
    %1494 = vmatpush1.msra.mxu0 %v1480
    %1495 = vmatprep.subr.mxu0 0.0
    %1496 = vmatpush1.msra.mxu0 %v1481
    %1497 = vmatprep.subr.mxu0 0.0
    %1498 = vmatpush1.msra.mxu0 0.0
    %1499 = vmatprep.subr.mxu0 0.0
    %1500 = vmatpush1.msra.mxu0 0.0
    %1501 = vmatprep.subr.mxu0 0.0
    %1502 = vmatpush1.msra.mxu0 0.0
    %1503 = vmatprep.subr.mxu0 0.0
    %1504 = vmatpush1.msra.mxu0 0.0
    %1505 = vmatprep.subr.mxu0 0.0
    %1506 = vmatpush1.msra.mxu0 0.0
    %1507 = vmatprep.subr.mxu0 0.0
    %1508 = vmatpush1.msra.mxu0 0.0
    %1509 = vmatprep.subr.mxu0 0.0
    %1510 = vmatpush1.msra.mxu0 0.0
    %1511 = vmatprep.subr.mxu0 0.0
    %1512 = vmatpush1.msra.mxu0 0.0
    %1513 = vmatprep.subr.mxu0 0.0
    %1514 = vmatpush1.msra.mxu0 0.0
    %1515 = vmatprep.subr.mxu0 0.0
    %1516 = vmatpush1.msra.mxu0 0.0
    %1517 = vmatprep.subr.mxu0 0.0
    %1518 = vmatpush1.msra.mxu0 0.0
    %1519 = vmatprep.subr.mxu0 0.0
    %1520 = vmatpush1.msra.mxu0 0.0
    %1521 = vmatprep.subr.mxu0 0.0
    %1522 = vmatpush1.msra.mxu0 0.0
    %1523 = vmatprep.subr.mxu0 0.0
    %1524 = vmatpush1.msra.mxu0 0.0
    %1525 = vmatprep.subr.mxu0 0.0
    %1526 = vmatpush1.msra.mxu0 0.0
    %1527 = vmatprep.subr.mxu0 0.0
    %1528 = vmatpush1.msra.mxu0 0.0
    %1529 = vmatprep.subr.mxu0 0.0
    %1530 = vmatpush1.msra.mxu0 0.0
    %1531 = vmatprep.subr.mxu0 0.0
    %1532 = vmatpush1.msra.mxu0 0.0
    %1533 = vmatprep.subr.mxu0 0.0
    %1534 = vmatpush1.msra.mxu0 0.0
    %1535 = vmatprep.subr.mxu0 0.0
    %1536 = vmatpush1.msra.mxu0 0.0
    %1537 = vmatprep.subr.mxu0 0.0
    %1538 = vmatpush1.msra.mxu0 0.0
    %1539 = vmatprep.subr.mxu0 0.0
    %1540 = vmatpush1.msra.mxu0 0.0
    %1541 = vmatprep.subr.mxu0 0.0
    %1542 = vmatpush1.msra.mxu0 0.0
    %1543 = vmatprep.subr.mxu0 0.0
    %1544 = vmatpush1.msra.mxu0 0.0
    %1545 = vmatprep.subr.mxu0 0.0
    %1546 = vmatpush1.msra.mxu0 0.0
    %1547 = vmatprep.subr.mxu0 0.0
    %1548 = vmatpush1.msra.mxu0 0.0
    %1549 = vmatprep.subr.mxu0 0.0
    %1550 = vmatpush1.msra.mxu0 0.0
    %1551 = vmatprep.subr.mxu0 0.0
    %1552 = vmatpush1.msra.mxu0 0.0
    %1553 = vmatprep.mubr.f32.mxu0 0.0
    %1554 = vmatmul.mubr.f32.gmra.mrb[0].mxu0 %v1398
    %v1555 = vpop.f32.mrb[0].mxu0
    %v1556 = vadd.f32 %v1487, %v1555
    %v1557 = vpop.f32.mrb[0].mxu0
    %1558 = vmatprep.mubr.f32.mxu0 0.0
    %1559 = vmatmul.mubr.f32.gmra.mrb[0].mxu0 %v1401
    %v1560 = vpop.f32.mrb[0].mxu0
    %v1561 = vadd.f32 %v1487, %v1560
    %v1562 = vpop.f32.mrb[0].mxu0
    %1563 = vdwg.mxu0
    %v1564 = vld [vmem:[#allocation21] sm:$0xff]
    %v1565 = vld [vmem:[#allocation21 + $0x8] sm:$0xff]
    %v1566 = vld [vmem:[#allocation21 + $0x10] sm:$0xff]
    %v1567 = vld [vmem:[#allocation21 + $0x18] sm:$0xff]
    %v1569 = vsel %vm260, %v1556, 0
    %v1572 = vsel %vm260, %v1561, 0
    %1574 = vmatprep.subr.mxu0 0.0
    %1575 = vmatpush1.msra.mxu0 %v1564
    %1576 = vmatprep.subr.mxu0 0.0
    %1577 = vmatpush1.msra.mxu0 %v1565
    %1578 = vmatprep.subr.mxu0 0.0
    %1579 = vmatpush1.msra.mxu0 %v1566
    %1580 = vmatprep.subr.mxu0 0.0
    %1581 = vmatpush1.msra.mxu0 %v1567
    %1582 = vmatprep.subr.mxu0 0.0
    %1583 = vmatpush1.msra.mxu0 0.0
    %1584 = vmatprep.subr.mxu0 0.0
    %1585 = vmatpush1.msra.mxu0 0.0
    %1586 = vmatprep.subr.mxu0 0.0
    %1587 = vmatpush1.msra.mxu0 0.0
    %1588 = vmatprep.subr.mxu0 0.0
    %1589 = vmatpush1.msra.mxu0 0.0
    %1590 = vmatprep.subr.mxu0 0.0
    %1591 = vmatpush1.msra.mxu0 0.0
    %1592 = vmatprep.subr.mxu0 0.0
    %1593 = vmatpush1.msra.mxu0 0.0
    %1594 = vmatprep.subr.mxu0 0.0
    %1595 = vmatpush1.msra.mxu0 0.0
    %1596 = vmatprep.subr.mxu0 0.0
    %1597 = vmatpush1.msra.mxu0 0.0
    %1598 = vmatprep.subr.mxu0 0.0
    %1599 = vmatpush1.msra.mxu0 0.0
    %1600 = vmatprep.subr.mxu0 0.0
    %1601 = vmatpush1.msra.mxu0 0.0
    %1602 = vmatprep.subr.mxu0 0.0
    %1603 = vmatpush1.msra.mxu0 0.0
    %1604 = vmatprep.subr.mxu0 0.0
    %1605 = vmatpush1.msra.mxu0 0.0
    %1606 = vmatprep.subr.mxu0 0.0
    %1607 = vmatpush1.msra.mxu0 0.0
    %1608 = vmatprep.subr.mxu0 0.0
    %1609 = vmatpush1.msra.mxu0 0.0
    %1610 = vmatprep.subr.mxu0 0.0
    %1611 = vmatpush1.msra.mxu0 0.0
    %1612 = vmatprep.subr.mxu0 0.0
    %1613 = vmatpush1.msra.mxu0 0.0
    %1614 = vmatprep.subr.mxu0 0.0
    %1615 = vmatpush1.msra.mxu0 0.0
    %1616 = vmatprep.subr.mxu0 0.0
    %1617 = vmatpush1.msra.mxu0 0.0
    %1618 = vmatprep.subr.mxu0 0.0
    %1619 = vmatpush1.msra.mxu0 0.0
    %1620 = vmatprep.subr.mxu0 0.0
    %1621 = vmatpush1.msra.mxu0 0.0
    %1622 = vmatprep.subr.mxu0 0.0
    %1623 = vmatpush1.msra.mxu0 0.0
    %1624 = vmatprep.subr.mxu0 0.0
    %1625 = vmatpush1.msra.mxu0 0.0
    %1626 = vmatprep.subr.mxu0 0.0
    %1627 = vmatpush1.msra.mxu0 0.0
    %1628 = vmatprep.subr.mxu0 0.0
    %1629 = vmatpush1.msra.mxu0 0.0
    %1630 = vmatprep.subr.mxu0 0.0
    %1631 = vmatpush1.msra.mxu0 0.0
    %1632 = vmatprep.subr.mxu0 0.0
    %1633 = vmatpush1.msra.mxu0 0.0
    %1634 = vmatprep.subr.mxu0 0.0
    %1635 = vmatpush1.msra.mxu0 0.0
    %1636 = vmatprep.subr.mxu0 0.0
    %1637 = vmatpush1.msra.mxu0 0.0
    %1638 = vmatprep.mubr.f32.mxu0 0.0
    %1639 = vmatmul.mubr.f32.gmra.mrb[0].mxu0 %v1569
    %v1640 = vpop.f32.mrb[0].mxu0
    %v1641 = vadd.f32 0.0, %v1640
    %v1642 = vpop.f32.mrb[0].mxu0
    %1643 = vmatprep.mubr.f32.mxu0 0.0
    %1644 = vmatmul.mubr.f32.gmra.mrb[0].mxu0 %v1572
    %v1645 = vpop.f32.mrb[0].mxu0
    %v1646 = vadd.f32 0.0, %v1645
    %v1647 = vpop.f32.mrb[0].mxu0
    %1648 = vdwg.mxu0
    %v1649 = vld [vmem:[#allocation22] sm:$0xff]
    %v1650 = vld [vmem:[#allocation22 + $0x8] sm:$0xff]
    %v1651 = vld [vmem:[#allocation22 + $0x10] sm:$0xff]
    %v1652 = vld [vmem:[#allocation22 + $0x18] sm:$0xff]
    %v1654 = vsel %vm260, %v1470, 0
    %v1657 = vsel %vm260, %v1475, 0
    %1659 = vmatprep.subr.mxu0 0.0
    %1660 = vmatpush1.msra.mxu0 %v1649
    %1661 = vmatprep.subr.mxu0 0.0
    %1662 = vmatpush1.msra.mxu0 %v1650
    %1663 = vmatprep.subr.mxu0 0.0
    %1664 = vmatpush1.msra.mxu0 %v1651
    %1665 = vmatprep.subr.mxu0 0.0
    %1666 = vmatpush1.msra.mxu0 %v1652
    %1667 = vmatprep.subr.mxu0 0.0
    %1668 = vmatpush1.msra.mxu0 0.0
    %1669 = vmatprep.subr.mxu0 0.0
    %1670 = vmatpush1.msra.mxu0 0.0
    %1671 = vmatprep.subr.mxu0 0.0
    %1672 = vmatpush1.msra.mxu0 0.0
    %1673 = vmatprep.subr.mxu0 0.0
    %1674 = vmatpush1.msra.mxu0 0.0
    %1675 = vmatprep.subr.mxu0 0.0
    %1676 = vmatpush1.msra.mxu0 0.0
    %1677 = vmatprep.subr.mxu0 0.0
    %1678 = vmatpush1.msra.mxu0 0.0
    %1679 = vmatprep.subr.mxu0 0.0
    %1680 = vmatpush1.msra.mxu0 0.0
    %1681 = vmatprep.subr.mxu0 0.0
    %1682 = vmatpush1.msra.mxu0 0.0
    %1683 = vmatprep.subr.mxu0 0.0
    %1684 = vmatpush1.msra.mxu0 0.0
    %1685 = vmatprep.subr.mxu0 0.0
    %1686 = vmatpush1.msra.mxu0 0.0
    %1687 = vmatprep.subr.mxu0 0.0
    %1688 = vmatpush1.msra.mxu0 0.0
    %1689 = vmatprep.subr.mxu0 0.0
    %1690 = vmatpush1.msra.mxu0 0.0
    %1691 = vmatprep.subr.mxu0 0.0
    %1692 = vmatpush1.msra.mxu0 0.0
    %1693 = vmatprep.subr.mxu0 0.0
    %1694 = vmatpush1.msra.mxu0 0.0
    %1695 = vmatprep.subr.mxu0 0.0
    %1696 = vmatpush1.msra.mxu0 0.0
    %1697 = vmatprep.subr.mxu0 0.0
    %1698 = vmatpush1.msra.mxu0 0.0
    %1699 = vmatprep.subr.mxu0 0.0
    %1700 = vmatpush1.msra.mxu0 0.0
    %1701 = vmatprep.subr.mxu0 0.0
    %1702 = vmatpush1.msra.mxu0 0.0
    %1703 = vmatprep.subr.mxu0 0.0
    %1704 = vmatpush1.msra.mxu0 0.0
    %1705 = vmatprep.subr.mxu0 0.0
    %1706 = vmatpush1.msra.mxu0 0.0
    %1707 = vmatprep.subr.mxu0 0.0
    %1708 = vmatpush1.msra.mxu0 0.0
    %1709 = vmatprep.subr.mxu0 0.0
    %1710 = vmatpush1.msra.mxu0 0.0
    %1711 = vmatprep.subr.mxu0 0.0
    %1712 = vmatpush1.msra.mxu0 0.0
    %1713 = vmatprep.subr.mxu0 0.0
    %1714 = vmatpush1.msra.mxu0 0.0
    %1715 = vmatprep.subr.mxu0 0.0
    %1716 = vmatpush1.msra.mxu0 0.0
    %1717 = vmatprep.subr.mxu0 0.0
    %1718 = vmatpush1.msra.mxu0 0.0
    %1719 = vmatprep.subr.mxu0 0.0
    %1720 = vmatpush1.msra.mxu0 0.0
    %1721 = vmatprep.subr.mxu0 0.0
    %1722 = vmatpush1.msra.mxu0 0.0
    %1723 = vmatprep.mubr.f32.mxu0 0.0
    %1724 = vmatmul.mubr.f32.gmra.mrb[0].mxu0 %v1654
    %v1725 = vpop.f32.mrb[0].mxu0
    %v1726 = vadd.f32 0.0, %v1725
    %v1727 = vpop.f32.mrb[0].mxu0
    %1728 = vmatprep.mubr.f32.mxu0 0.0
    %1729 = vmatmul.mubr.f32.gmra.mrb[0].mxu0 %v1657
    %v1730 = vpop.f32.mrb[0].mxu0
    %v1731 = vadd.f32 0.0, %v1730
    %v1732 = vpop.f32.mrb[0].mxu0
    %1733 = vdwg.mxu0
    %v1734 = vld [vmem:[%s23] sm:$0x1]
    %v1735 = vadd.f32 %v1641, %v1726
    %v1737 = vlaneseq
    %v1738 = vshrl.u32 %v1737, 7
    %v1739 = vsub.s32 0, %v1738
    %v1740 = vrot.slane %v1734, %v1739
    %v1742 = vadd.f32 %v1735, %v1740
    %v1743 = vadd.f32 %v1646, %v1731
    %v1744 = vadd.f32 %v1743, %v1740
    %v1745 = vadd.f32 %v1646, %v1726
    %v1746 = vadd.f32 %v1745, %v1740
    %v1747 = vadd.f32 %v1641, %v1731
    %v1748 = vadd.f32 %v1747, %v1740
    %1750 = vrot.lane.b32.xlu0 %v1744, 32
    %v1751 = vpop.permute.xlu0 %1750
    %1754 = vrot.lane.b32.xlu0 %v1746, 64
    %v1755 = vpop.permute.xlu0 %1754
    %1758 = vrot.lane.b32.xlu0 %v1748, 96
    %v1759 = vpop.permute.xlu0 %1758
    %v1761 = vsel %vm260, %v1742, %v1751
    %v1762 = vsel %vm1258, %v1761, %v1755
    %vm1763 = vcmask 785408
    %v1764 = vsel %vm1763, %v1762, %v1759
    %1765 = vst [vmem:[%s24] sm:$0xff] %v1764
    // Predicated region
    $region154: #{switchtab_forward.1} parent=1 // pred_check
      _
    $region155: #{switchtab_forward.1} parent=1 // pred_check_branch
      %1767 = sbr.rel (0) target = $region157
    $region156: #{switchtab_forward.1} parent=1 // pred_region
      _
    $region157: #{switchtab_forward.1} parent=1 // pred_fallthru
      _
    // Predicated region
    $region158: #{switchtab_forward.1} parent=1 // pred_check
      _
    $region159: #{switchtab_forward.1} parent=1 // pred_check_branch
      %1769 = sbr.rel (0) target = $region161
    $region160: #{switchtab_forward.1} parent=1 // pred_region
      _
    $region161: #{switchtab_forward.1} parent=1 // pred_fallthru
      _
    %1770 = vsyncpa [#allocation3], 1
    %1771 = vsyncpa [#allocation5], 1
    %1772 = vsyncpa [#allocation8], 1
    %1773 = vsyncpa [#allocation11], 1
    %1774 = vsyncpa [#allocation14], 1
    %1775 = vsyncpa [#allocation17], 1
    %1776 = vsyncpa [#allocation20], 1
    %1777 = vsyncpa [#allocation23], 1

</llo_original>
